<compile_context>
chip_gen: v7x
topology: tpu7x:2x2x1
jax: 0.10.0
libtpu: 0.0.40
codegen_flags: <defaults>
</compile_context>

<pallas_src>
import jax
import jax.numpy as jnp
from jax import lax
from jax.experimental import pallas as pl
from jax.experimental.pallas import tpu as pltpu


# ----------------------------------------------------------------------------
# Fused Pallas kernel: all LSTM layers (wavefront) + FC in one invocation
# ----------------------------------------------------------------------------
def _make_fused_lstm_kernel(num_layers, T, Bp, H):
    """Build a kernel closed over static sizes.

    Ref order (as passed by pallas_call):
      gx0_ref                    (T*Bp, 4H)  hoisted layer-0 input projection (+bias)
      whh0_ref                   (H, 4H)     layer-0 recurrent weights
      [wih_l (H,4H), whh_l (H,4H), b_l (1,4H)]  for layers 1..num_layers-1
      fcw_ref (H, O), fcb_ref (1, O)
      out_ref (Bp, O)
    """

    def kernel(*refs):
        gx0_ref = refs[0]
        whh0_ref = refs[1]
        layer_refs = refs[2:2 + 3 * (num_layers - 1)]
        fcw_ref = refs[2 + 3 * (num_layers - 1)]
        fcb_ref = refs[3 + 3 * (num_layers - 1)]
        out_ref = refs[4 + 3 * (num_layers - 1)]

        gx0 = gx0_ref[...]                                     # (T*Bp, 4H)
        wih = [None]
        whh = [whh0_ref[...]]
        bias = [None]
        for l in range(1, num_layers):
            wih.append(layer_refs[3 * (l - 1)][...])           # (H, 4H)
            whh.append(layer_refs[3 * (l - 1) + 1][...])       # (H, 4H)
            bias.append(layer_refs[3 * (l - 1) + 2][...])      # (1, 4H)

        h = [jnp.zeros((Bp, H), jnp.float32) for _ in range(num_layers)]
        c = [jnp.zeros((Bp, H), jnp.float32) for _ in range(num_layers)]

        # Layer-time wavefront: wave w processes step (l, t=w-l) for every
        # active layer.  All steps inside a wave are mutually independent, so
        # the dependent-step chain length is T + num_layers - 1.
        for w in range(T + num_layers - 1):
            h_prev = list(h)                 # snapshot of previous-wave outputs
            for l in range(num_layers):
                t = w - l
                if t < 0 or t >= T:
                    continue
                if l == 0:
                    # input projection hoisted to the wrapper (lane-dense gx0)
                    g = gx0[t * Bp:(t + 1) * Bp, :] + jnp.dot(
                        h[0], whh[0], preferred_element_type=jnp.float32)
                else:
                    # two small independent matmuls -> MXU FIFO pipelines them
                    g = (jnp.dot(h_prev[l - 1], wih[l],
                                 preferred_element_type=jnp.float32)
                         + jnp.dot(h[l], whh[l],
                                   preferred_element_type=jnp.float32)
                         + bias[l])                             # (Bp, 4H)

                # 3 EUP pushes / step: whole-vreg sigmoid + tanh, slice after.
                sig = jax.nn.sigmoid(g)                         # (Bp, 4H)
                tnh = jnp.tanh(g)                               # (Bp, 4H)
                i_g = sig[:, 0 * H:1 * H]
                f_g = sig[:, 1 * H:2 * H]
                o_g = sig[:, 3 * H:4 * H]
                g_g = tnh[:, 2 * H:3 * H]
                c[l] = f_g * c[l] + i_g * g_g
                h[l] = o_g * jnp.tanh(c[l])

        # hidden[-1] of the last layer -> FC, fused in the same kernel.
        out_ref[...] = (
            jnp.dot(h[num_layers - 1], fcw_ref[...],
                    preferred_element_type=jnp.float32)
            + fcb_ref[...])

    return kernel


# ----------------------------------------------------------------------------
# Wrapper (parameter prep + single pallas_call)
# ----------------------------------------------------------------------------
def lstm_model_forward(x, params):
    """Full forward pass mirroring LSTM.forward().

    x: (B, input_dim, T)  -- same axis convention as the PyTorch module input.
    Returns (B, output_size).
    """
    B, D, T = x.shape
    num_layers = len(params["lstm"])
    H = params["lstm"][0]["w_hh"].shape[1]
    O = params["fc_w"].shape[0]
    G = 4 * H
    Bp = ((B + 7) // 8) * 8                      # pad batch to sublane multiple

    # (B, D, T) -> time-major (T, B, D), pad batch, flatten to (T*Bp, D).
    x_tbd = jnp.transpose(x, (2, 0, 1)).astype(jnp.float32)
    x_tbd = jnp.pad(x_tbd, ((0, 0), (0, Bp - B), (0, 0)))
    x_flat = x_tbd.reshape(T * Bp, D)

    # Layer-0 input projection hoisted to plain XLA (K=D is tiny / ill-shaped
    # for the MXU); the kernel receives a lane-dense (T*Bp, 4H) tensor.
    l0 = params["lstm"][0]
    gx0 = (x_flat @ l0["w_ih"].T.astype(jnp.float32)
           + (l0["b_ih"] + l0["b_hh"]).astype(jnp.float32))     # (T*Bp, 4H)

    vmem_spec = pl.BlockSpec(memory_space=pltpu.MemorySpace.VMEM)

    args = [gx0, l0["w_hh"].T.astype(jnp.float32)]              # (H, 4H)
    in_specs = [vmem_spec, vmem_spec]
    for layer in params["lstm"][1:]:
        args += [
            layer["w_ih"].T.astype(jnp.float32),                        # (H, 4H)
            layer["w_hh"].T.astype(jnp.float32),                        # (H, 4H)
            (layer["b_ih"] + layer["b_hh"]).reshape(1, G).astype(jnp.float32),
        ]
        in_specs += [vmem_spec] * 3
    args += [
        params["fc_w"].T.astype(jnp.float32),                           # (H, O)
        params["fc_b"].reshape(1, O).astype(jnp.float32),
    ]
    in_specs += [vmem_spec] * 2

    kernel = _make_fused_lstm_kernel(num_layers, T, Bp, H)

    out_pad = pl.pallas_call(
        kernel,
        out_shape=jax.ShapeDtypeStruct((Bp, O), jnp.float32),
        in_specs=in_specs,
        out_specs=vmem_spec,
    )(*args)
    return out_pad[:B]


# ----------------------------------------------------------------------------
# Pure-JAX reference (for correctness check only)
# ----------------------------------------------------------------------------
def lstm_model_reference(x, params):
    x_btd = jnp.transpose(x, (0, 2, 1)).astype(jnp.float32)   # (B, T, D)
    h_seq = jnp.transpose(x_btd, (1, 0, 2))                   # (T, B, D)
    h_last = None
    for layer in params["lstm"]:
        H = layer["w_hh"].shape[1]
        B = h_seq.shape[1]
        wih_t = layer["w_ih"].T
        whh_t = layer["w_hh"].T
        bias = layer["b_ih"] + layer["b_hh"]

        def step(carry, x_t):
            h, c = carry
            gates = x_t @ wih_t + h @ whh_t + bias
            i = jax.nn.sigmoid(gates[:, 0 * H:1 * H])
            f = jax.nn.sigmoid(gates[:, 1 * H:2 * H])
            g = jnp.tanh(gates[:, 2 * H:3 * H])
            o = jax.nn.sigmoid(gates[:, 3 * H:4 * H])
            c_new = f * c + i * g
            h_new = o * jnp.tanh(c_new)
            return (h_new, c_new), h_new

        init = (jnp.zeros((B, H), jnp.float32), jnp.zeros((B, H), jnp.float32))
        (h_last, _), h_seq = lax.scan(step, init, h_seq)
    return h_last @ params["fc_w"].T + params["fc_b"]


# ----------------------------------------------------------------------------
# Deterministic parameter init (PyTorch-style uniform(-1/sqrt(H), 1/sqrt(H)))
# ----------------------------------------------------------------------------
def init_params(key, input_dim, hidden_dim, num_layers, output_size):
    bound = 1.0 / jnp.sqrt(hidden_dim)
    layers = []
    for l in range(num_layers):
        d_in = input_dim if l == 0 else hidden_dim
        key, k1, k2, k3, k4 = jax.random.split(key, 5)
        layers.append({
            "w_ih": jax.random.uniform(k1, (4 * hidden_dim, d_in), jnp.float32,
                                       -bound, bound),
            "w_hh": jax.random.uniform(k2, (4 * hidden_dim, hidden_dim),
                                       jnp.float32, -bound, bound),
            "b_ih": jax.random.uniform(k3, (4 * hidden_dim,), jnp.float32,
                                       -bound, bound),
            "b_hh": jax.random.uniform(k4, (4 * hidden_dim,), jnp.float32,
                                       -bound, bound),
        })
    key, kw, kb = jax.random.split(key, 3)
    fc_bound = 1.0 / jnp.sqrt(hidden_dim)
    params = {
        "lstm": layers,
        "fc_w": jax.random.uniform(kw, (output_size, hidden_dim), jnp.float32,
                                   -fc_bound, fc_bound),
        "fc_b": jax.random.uniform(kb, (output_size,), jnp.float32,
                                   -fc_bound, fc_bound),
    }
    return params


# ----------------------------------------------------------------------------
if __name__ == "__main__":
    # hypers: input_dim=4, hidden_dim=32, num_layers=2, dropout=0.0,
    #         bidirectional=False, output_size=2
    B, D, T = 2, 4, 8
    H, NUM_LAYERS, OUT = 32, 2, 2

    key = jax.random.PRNGKey(0)
    key, kx = jax.random.split(key)
    # PyTorch-style input: (batch, input_dim, seq)
    x = jax.random.normal(kx, (B, D, T), jnp.float32)

    params = init_params(key, D, H, NUM_LAYERS, OUT)

    out = lstm_model_forward(x, params)
    out = jax.block_until_ready(out)

    ref = lstm_model_reference(x, params)
    assert out.shape == (B, OUT), out.shape
    assert jnp.allclose(out, ref, atol=1e-5, rtol=1e-5), (out, ref)

    print("KERNEL_OK")
</pallas_src>

<mosaic_0001>
module attributes {stable_mosaic.version = 11 : i64} {
  func.func @kernel(%arg0: memref<64x128xf32, #tpu.memory_space<vmem>>, %arg1: memref<32x128xf32, #tpu.memory_space<vmem>>, %arg2: memref<32x128xf32, #tpu.memory_space<vmem>>, %arg3: memref<32x128xf32, #tpu.memory_space<vmem>>, %arg4: memref<1x128xf32, #tpu.memory_space<vmem>>, %arg5: memref<32x2xf32, #tpu.memory_space<vmem>>, %arg6: memref<1x2xf32, #tpu.memory_space<vmem>>, %arg7: memref<8x2xf32, #tpu.memory_space<vmem>>) attributes {dimension_semantics = [], scalar_prefetch = 0 : i64, scratch_operands = 0 : i64, tpu.core_type = #tpu.core_type<tc>} {
    %c0 = arith.constant 0 : index
    %c0_0 = arith.constant 0 : index
    %0 = vector.load %arg0[%c0, %c0_0] : memref<64x128xf32, #tpu.memory_space<vmem>>, vector<64x128xf32>
    %c0_1 = arith.constant 0 : index
    %c0_2 = arith.constant 0 : index
    %1 = vector.load %arg1[%c0_1, %c0_2] : memref<32x128xf32, #tpu.memory_space<vmem>>, vector<32x128xf32>
    %c0_3 = arith.constant 0 : index
    %c0_4 = arith.constant 0 : index
    %2 = vector.load %arg2[%c0_3, %c0_4] : memref<32x128xf32, #tpu.memory_space<vmem>>, vector<32x128xf32>
    %c0_5 = arith.constant 0 : index
    %c0_6 = arith.constant 0 : index
    %3 = vector.load %arg3[%c0_5, %c0_6] : memref<32x128xf32, #tpu.memory_space<vmem>>, vector<32x128xf32>
    %c0_7 = arith.constant 0 : index
    %c0_8 = arith.constant 0 : index
    %4 = vector.load %arg4[%c0_7, %c0_8] : memref<1x128xf32, #tpu.memory_space<vmem>>, vector<1x128xf32>
    %cst = arith.constant 0.000000e+00 : f32
    %5 = vector.broadcast %cst : f32 to vector<8x32xf32>
    %cst_9 = arith.constant 0.000000e+00 : f32
    %6 = vector.broadcast %cst_9 : f32 to vector<8x32xf32>
    %cst_10 = arith.constant 0.000000e+00 : f32
    %7 = vector.broadcast %cst_10 : f32 to vector<8x32xf32>
    %cst_11 = arith.constant 0.000000e+00 : f32
    %8 = vector.broadcast %cst_11 : f32 to vector<8x32xf32>
    %9 = vector.extract_strided_slice %0 {offsets = [0, 0], sizes = [8, 128], strides = [1, 1]} : vector<64x128xf32> to vector<8x128xf32>
    %cst_12 = arith.constant dense<0.000000e+00> : vector<8x128xf32>
    %10 = tpu.matmul %5, %1, %cst_12 {dimension_numbers = #tpu.dot_dimension_numbers<[1], [0], [0], [1], [0, 0, 1, 1], [], []>} : vector<8x32xf32>, vector<32x128xf32>, vector<8x128xf32> -> vector<8x128xf32>
    %11 = arith.addf %9, %10 : vector<8x128xf32>
    %12 = arith.negf %11 : vector<8x128xf32>
    %13 = math.exp %12 : vector<8x128xf32>
    %cst_13 = arith.constant 1.000000e+00 : f32
    %14 = vector.broadcast %cst_13 : f32 to vector<8x128xf32>
    %15 = arith.addf %14, %13 : vector<8x128xf32>
    %16 = arith.divf %14, %15 : vector<8x128xf32>
    %17 = math.tanh %11 : vector<8x128xf32>
    %18 = vector.extract_strided_slice %16 {offsets = [0, 0], sizes = [8, 32], strides = [1, 1]} : vector<8x128xf32> to vector<8x32xf32>
    %19 = vector.extract_strided_slice %16 {offsets = [0, 32], sizes = [8, 32], strides = [1, 1]} : vector<8x128xf32> to vector<8x32xf32>
    %20 = vector.extract_strided_slice %16 {offsets = [0, 96], sizes = [8, 32], strides = [1, 1]} : vector<8x128xf32> to vector<8x32xf32>
    %21 = vector.extract_strided_slice %17 {offsets = [0, 64], sizes = [8, 32], strides = [1, 1]} : vector<8x128xf32> to vector<8x32xf32>
    %22 = arith.mulf %19, %7 : vector<8x32xf32>
    %23 = arith.mulf %18, %21 : vector<8x32xf32>
    %24 = arith.addf %22, %23 : vector<8x32xf32>
    %25 = math.tanh %24 : vector<8x32xf32>
    %26 = arith.mulf %20, %25 : vector<8x32xf32>
    %27 = vector.extract_strided_slice %0 {offsets = [8, 0], sizes = [8, 128], strides = [1, 1]} : vector<64x128xf32> to vector<8x128xf32>
    %cst_14 = arith.constant dense<0.000000e+00> : vector<8x128xf32>
    %28 = tpu.matmul %26, %1, %cst_14 {dimension_numbers = #tpu.dot_dimension_numbers<[1], [0], [0], [1], [0, 0, 1, 1], [], []>} : vector<8x32xf32>, vector<32x128xf32>, vector<8x128xf32> -> vector<8x128xf32>
    %29 = arith.addf %27, %28 : vector<8x128xf32>
    %30 = arith.negf %29 : vector<8x128xf32>
    %31 = math.exp %30 : vector<8x128xf32>
    %cst_15 = arith.constant 1.000000e+00 : f32
    %32 = vector.broadcast %cst_15 : f32 to vector<8x128xf32>
    %33 = arith.addf %32, %31 : vector<8x128xf32>
    %34 = arith.divf %32, %33 : vector<8x128xf32>
    %35 = math.tanh %29 : vector<8x128xf32>
    %36 = vector.extract_strided_slice %34 {offsets = [0, 0], sizes = [8, 32], strides = [1, 1]} : vector<8x128xf32> to vector<8x32xf32>
    %37 = vector.extract_strided_slice %34 {offsets = [0, 32], sizes = [8, 32], strides = [1, 1]} : vector<8x128xf32> to vector<8x32xf32>
    %38 = vector.extract_strided_slice %34 {offsets = [0, 96], sizes = [8, 32], strides = [1, 1]} : vector<8x128xf32> to vector<8x32xf32>
    %39 = vector.extract_strided_slice %35 {offsets = [0, 64], sizes = [8, 32], strides = [1, 1]} : vector<8x128xf32> to vector<8x32xf32>
    %40 = arith.mulf %37, %24 : vector<8x32xf32>
    %41 = arith.mulf %36, %39 : vector<8x32xf32>
    %42 = arith.addf %40, %41 : vector<8x32xf32>
    %43 = math.tanh %42 : vector<8x32xf32>
    %44 = arith.mulf %38, %43 : vector<8x32xf32>
    %cst_16 = arith.constant dense<0.000000e+00> : vector<8x128xf32>
    %45 = tpu.matmul %26, %2, %cst_16 {dimension_numbers = #tpu.dot_dimension_numbers<[1], [0], [0], [1], [0, 0, 1, 1], [], []>} : vector<8x32xf32>, vector<32x128xf32>, vector<8x128xf32> -> vector<8x128xf32>
    %cst_17 = arith.constant dense<0.000000e+00> : vector<8x128xf32>
    %46 = tpu.matmul %6, %3, %cst_17 {dimension_numbers = #tpu.dot_dimension_numbers<[1], [0], [0], [1], [0, 0, 1, 1], [], []>} : vector<8x32xf32>, vector<32x128xf32>, vector<8x128xf32> -> vector<8x128xf32>
    %47 = arith.addf %45, %46 : vector<8x128xf32>
    %48 = vector.broadcast %4 : vector<1x128xf32> to vector<8x128xf32>
    %49 = arith.addf %47, %48 : vector<8x128xf32>
    %50 = arith.negf %49 : vector<8x128xf32>
    %51 = math.exp %50 : vector<8x128xf32>
    %cst_18 = arith.constant 1.000000e+00 : f32
    %52 = vector.broadcast %cst_18 : f32 to vector<8x128xf32>
    %53 = arith.addf %52, %51 : vector<8x128xf32>
    %54 = arith.divf %52, %53 : vector<8x128xf32>
    %55 = math.tanh %49 : vector<8x128xf32>
    %56 = vector.extract_strided_slice %54 {offsets = [0, 0], sizes = [8, 32], strides = [1, 1]} : vector<8x128xf32> to vector<8x32xf32>
    %57 = vector.extract_strided_slice %54 {offsets = [0, 32], sizes = [8, 32], strides = [1, 1]} : vector<8x128xf32> to vector<8x32xf32>
    %58 = vector.extract_strided_slice %54 {offsets = [0, 96], sizes = [8, 32], strides = [1, 1]} : vector<8x128xf32> to vector<8x32xf32>
    %59 = vector.extract_strided_slice %55 {offsets = [0, 64], sizes = [8, 32], strides = [1, 1]} : vector<8x128xf32> to vector<8x32xf32>
    %60 = arith.mulf %57, %8 : vector<8x32xf32>
    %61 = arith.mulf %56, %59 : vector<8x32xf32>
    %62 = arith.addf %60, %61 : vector<8x32xf32>
    %63 = math.tanh %62 : vector<8x32xf32>
    %64 = arith.mulf %58, %63 : vector<8x32xf32>
    %65 = vector.extract_strided_slice %0 {offsets = [16, 0], sizes = [8, 128], strides = [1, 1]} : vector<64x128xf32> to vector<8x128xf32>
    %cst_19 = arith.constant dense<0.000000e+00> : vector<8x128xf32>
    %66 = tpu.matmul %44, %1, %cst_19 {dimension_numbers = #tpu.dot_dimension_numbers<[1], [0], [0], [1], [0, 0, 1, 1], [], []>} : vector<8x32xf32>, vector<32x128xf32>, vector<8x128xf32> -> vector<8x128xf32>
    %67 = arith.addf %65, %66 : vector<8x128xf32>
    %68 = arith.negf %67 : vector<8x128xf32>
    %69 = math.exp %68 : vector<8x128xf32>
    %cst_20 = arith.constant 1.000000e+00 : f32
    %70 = vector.broadcast %cst_20 : f32 to vector<8x128xf32>
    %71 = arith.addf %70, %69 : vector<8x128xf32>
    %72 = arith.divf %70, %71 : vector<8x128xf32>
    %73 = math.tanh %67 : vector<8x128xf32>
    %74 = vector.extract_strided_slice %72 {offsets = [0, 0], sizes = [8, 32], strides = [1, 1]} : vector<8x128xf32> to vector<8x32xf32>
    %75 = vector.extract_strided_slice %72 {offsets = [0, 32], sizes = [8, 32], strides = [1, 1]} : vector<8x128xf32> to vector<8x32xf32>
    %76 = vector.extract_strided_slice %72 {offsets = [0, 96], sizes = [8, 32], strides = [1, 1]} : vector<8x128xf32> to vector<8x32xf32>
    %77 = vector.extract_strided_slice %73 {offsets = [0, 64], sizes = [8, 32], strides = [1, 1]} : vector<8x128xf32> to vector<8x32xf32>
    %78 = arith.mulf %75, %42 : vector<8x32xf32>
    %79 = arith.mulf %74, %77 : vector<8x32xf32>
    %80 = arith.addf %78, %79 : vector<8x32xf32>
    %81 = math.tanh %80 : vector<8x32xf32>
    %82 = arith.mulf %76, %81 : vector<8x32xf32>
    %cst_21 = arith.constant dense<0.000000e+00> : vector<8x128xf32>
    %83 = tpu.matmul %44, %2, %cst_21 {dimension_numbers = #tpu.dot_dimension_numbers<[1], [0], [0], [1], [0, 0, 1, 1], [], []>} : vector<8x32xf32>, vector<32x128xf32>, vector<8x128xf32> -> vector<8x128xf32>
    %cst_22 = arith.constant dense<0.000000e+00> : vector<8x128xf32>
    %84 = tpu.matmul %64, %3, %cst_22 {dimension_numbers = #tpu.dot_dimension_numbers<[1], [0], [0], [1], [0, 0, 1, 1], [], []>} : vector<8x32xf32>, vector<32x128xf32>, vector<8x128xf32> -> vector<8x128xf32>
    %85 = arith.addf %83, %84 : vector<8x128xf32>
    %86 = vector.broadcast %4 : vector<1x128xf32> to vector<8x128xf32>
    %87 = arith.addf %85, %86 : vector<8x128xf32>
    %88 = arith.negf %87 : vector<8x128xf32>
    %89 = math.exp %88 : vector<8x128xf32>
    %cst_23 = arith.constant 1.000000e+00 : f32
    %90 = vector.broadcast %cst_23 : f32 to vector<8x128xf32>
    %91 = arith.addf %90, %89 : vector<8x128xf32>
    %92 = arith.divf %90, %91 : vector<8x128xf32>
    %93 = math.tanh %87 : vector<8x128xf32>
    %94 = vector.extract_strided_slice %92 {offsets = [0, 0], sizes = [8, 32], strides = [1, 1]} : vector<8x128xf32> to vector<8x32xf32>
    %95 = vector.extract_strided_slice %92 {offsets = [0, 32], sizes = [8, 32], strides = [1, 1]} : vector<8x128xf32> to vector<8x32xf32>
    %96 = vector.extract_strided_slice %92 {offsets = [0, 96], sizes = [8, 32], strides = [1, 1]} : vector<8x128xf32> to vector<8x32xf32>
    %97 = vector.extract_strided_slice %93 {offsets = [0, 64], sizes = [8, 32], strides = [1, 1]} : vector<8x128xf32> to vector<8x32xf32>
    %98 = arith.mulf %95, %62 : vector<8x32xf32>
    %99 = arith.mulf %94, %97 : vector<8x32xf32>
    %100 = arith.addf %98, %99 : vector<8x32xf32>
    %101 = math.tanh %100 : vector<8x32xf32>
    %102 = arith.mulf %96, %101 : vector<8x32xf32>
    %103 = vector.extract_strided_slice %0 {offsets = [24, 0], sizes = [8, 128], strides = [1, 1]} : vector<64x128xf32> to vector<8x128xf32>
    %cst_24 = arith.constant dense<0.000000e+00> : vector<8x128xf32>
    %104 = tpu.matmul %82, %1, %cst_24 {dimension_numbers = #tpu.dot_dimension_numbers<[1], [0], [0], [1], [0, 0, 1, 1], [], []>} : vector<8x32xf32>, vector<32x128xf32>, vector<8x128xf32> -> vector<8x128xf32>
    %105 = arith.addf %103, %104 : vector<8x128xf32>
    %106 = arith.negf %105 : vector<8x128xf32>
    %107 = math.exp %106 : vector<8x128xf32>
    %cst_25 = arith.constant 1.000000e+00 : f32
    %108 = vector.broadcast %cst_25 : f32 to vector<8x128xf32>
    %109 = arith.addf %108, %107 : vector<8x128xf32>
    %110 = arith.divf %108, %109 : vector<8x128xf32>
    %111 = math.tanh %105 : vector<8x128xf32>
    %112 = vector.extract_strided_slice %110 {offsets = [0, 0], sizes = [8, 32], strides = [1, 1]} : vector<8x128xf32> to vector<8x32xf32>
    %113 = vector.extract_strided_slice %110 {offsets = [0, 32], sizes = [8, 32], strides = [1, 1]} : vector<8x128xf32> to vector<8x32xf32>
    %114 = vector.extract_strided_slice %110 {offsets = [0, 96], sizes = [8, 32], strides = [1, 1]} : vector<8x128xf32> to vector<8x32xf32>
    %115 = vector.extract_strided_slice %111 {offsets = [0, 64], sizes = [8, 32], strides = [1, 1]} : vector<8x128xf32> to vector<8x32xf32>
    %116 = arith.mulf %113, %80 : vector<8x32xf32>
    %117 = arith.mulf %112, %115 : vector<8x32xf32>
    %118 = arith.addf %116, %117 : vector<8x32xf32>
    %119 = math.tanh %118 : vector<8x32xf32>
    %120 = arith.mulf %114, %119 : vector<8x32xf32>
    %cst_26 = arith.constant dense<0.000000e+00> : vector<8x128xf32>
    %121 = tpu.matmul %82, %2, %cst_26 {dimension_numbers = #tpu.dot_dimension_numbers<[1], [0], [0], [1], [0, 0, 1, 1], [], []>} : vector<8x32xf32>, vector<32x128xf32>, vector<8x128xf32> -> vector<8x128xf32>
    %cst_27 = arith.constant dense<0.000000e+00> : vector<8x128xf32>
    %122 = tpu.matmul %102, %3, %cst_27 {dimension_numbers = #tpu.dot_dimension_numbers<[1], [0], [0], [1], [0, 0, 1, 1], [], []>} : vector<8x32xf32>, vector<32x128xf32>, vector<8x128xf32> -> vector<8x128xf32>
    %123 = arith.addf %121, %122 : vector<8x128xf32>
    %124 = vector.broadcast %4 : vector<1x128xf32> to vector<8x128xf32>
    %125 = arith.addf %123, %124 : vector<8x128xf32>
    %126 = arith.negf %125 : vector<8x128xf32>
    %127 = math.exp %126 : vector<8x128xf32>
    %cst_28 = arith.constant 1.000000e+00 : f32
    %128 = vector.broadcast %cst_28 : f32 to vector<8x128xf32>
    %129 = arith.addf %128, %127 : vector<8x128xf32>
    %130 = arith.divf %128, %129 : vector<8x128xf32>
    %131 = math.tanh %125 : vector<8x128xf32>
    %132 = vector.extract_strided_slice %130 {offsets = [0, 0], sizes = [8, 32], strides = [1, 1]} : vector<8x128xf32> to vector<8x32xf32>
    %133 = vector.extract_strided_slice %130 {offsets = [0, 32], sizes = [8, 32], strides = [1, 1]} : vector<8x128xf32> to vector<8x32xf32>
    %134 = vector.extract_strided_slice %130 {offsets = [0, 96], sizes = [8, 32], strides = [1, 1]} : vector<8x128xf32> to vector<8x32xf32>
    %135 = vector.extract_strided_slice %131 {offsets = [0, 64], sizes = [8, 32], strides = [1, 1]} : vector<8x128xf32> to vector<8x32xf32>
    %136 = arith.mulf %133, %100 : vector<8x32xf32>
    %137 = arith.mulf %132, %135 : vector<8x32xf32>
    %138 = arith.addf %136, %137 : vector<8x32xf32>
    %139 = math.tanh %138 : vector<8x32xf32>
    %140 = arith.mulf %134, %139 : vector<8x32xf32>
    %141 = vector.extract_strided_slice %0 {offsets = [32, 0], sizes = [8, 128], strides = [1, 1]} : vector<64x128xf32> to vector<8x128xf32>
    %cst_29 = arith.constant dense<0.000000e+00> : vector<8x128xf32>
    %142 = tpu.matmul %120, %1, %cst_29 {dimension_numbers = #tpu.dot_dimension_numbers<[1], [0], [0], [1], [0, 0, 1, 1], [], []>} : vector<8x32xf32>, vector<32x128xf32>, vector<8x128xf32> -> vector<8x128xf32>
    %143 = arith.addf %141, %142 : vector<8x128xf32>
    %144 = arith.negf %143 : vector<8x128xf32>
    %145 = math.exp %144 : vector<8x128xf32>
    %cst_30 = arith.constant 1.000000e+00 : f32
    %146 = vector.broadcast %cst_30 : f32 to vector<8x128xf32>
    %147 = arith.addf %146, %145 : vector<8x128xf32>
    %148 = arith.divf %146, %147 : vector<8x128xf32>
    %149 = math.tanh %143 : vector<8x128xf32>
    %150 = vector.extract_strided_slice %148 {offsets = [0, 0], sizes = [8, 32], strides = [1, 1]} : vector<8x128xf32> to vector<8x32xf32>
    %151 = vector.extract_strided_slice %148 {offsets = [0, 32], sizes = [8, 32], strides = [1, 1]} : vector<8x128xf32> to vector<8x32xf32>
    %152 = vector.extract_strided_slice %148 {offsets = [0, 96], sizes = [8, 32], strides = [1, 1]} : vector<8x128xf32> to vector<8x32xf32>
    %153 = vector.extract_strided_slice %149 {offsets = [0, 64], sizes = [8, 32], strides = [1, 1]} : vector<8x128xf32> to vector<8x32xf32>
    %154 = arith.mulf %151, %118 : vector<8x32xf32>
    %155 = arith.mulf %150, %153 : vector<8x32xf32>
    %156 = arith.addf %154, %155 : vector<8x32xf32>
    %157 = math.tanh %156 : vector<8x32xf32>
    %158 = arith.mulf %152, %157 : vector<8x32xf32>
    %cst_31 = arith.constant dense<0.000000e+00> : vector<8x128xf32>
    %159 = tpu.matmul %120, %2, %cst_31 {dimension_numbers = #tpu.dot_dimension_numbers<[1], [0], [0], [1], [0, 0, 1, 1], [], []>} : vector<8x32xf32>, vector<32x128xf32>, vector<8x128xf32> -> vector<8x128xf32>
    %cst_32 = arith.constant dense<0.000000e+00> : vector<8x128xf32>
    %160 = tpu.matmul %140, %3, %cst_32 {dimension_numbers = #tpu.dot_dimension_numbers<[1], [0], [0], [1], [0, 0, 1, 1], [], []>} : vector<8x32xf32>, vector<32x128xf32>, vector<8x128xf32> -> vector<8x128xf32>
    %161 = arith.addf %159, %160 : vector<8x128xf32>
    %162 = vector.broadcast %4 : vector<1x128xf32> to vector<8x128xf32>
    %163 = arith.addf %161, %162 : vector<8x128xf32>
    %164 = arith.negf %163 : vector<8x128xf32>
    %165 = math.exp %164 : vector<8x128xf32>
    %cst_33 = arith.constant 1.000000e+00 : f32
    %166 = vector.broadcast %cst_33 : f32 to vector<8x128xf32>
    %167 = arith.addf %166, %165 : vector<8x128xf32>
    %168 = arith.divf %166, %167 : vector<8x128xf32>
    %169 = math.tanh %163 : vector<8x128xf32>
    %170 = vector.extract_strided_slice %168 {offsets = [0, 0], sizes = [8, 32], strides = [1, 1]} : vector<8x128xf32> to vector<8x32xf32>
    %171 = vector.extract_strided_slice %168 {offsets = [0, 32], sizes = [8, 32], strides = [1, 1]} : vector<8x128xf32> to vector<8x32xf32>
    %172 = vector.extract_strided_slice %168 {offsets = [0, 96], sizes = [8, 32], strides = [1, 1]} : vector<8x128xf32> to vector<8x32xf32>
    %173 = vector.extract_strided_slice %169 {offsets = [0, 64], sizes = [8, 32], strides = [1, 1]} : vector<8x128xf32> to vector<8x32xf32>
    %174 = arith.mulf %171, %138 : vector<8x32xf32>
    %175 = arith.mulf %170, %173 : vector<8x32xf32>
    %176 = arith.addf %174, %175 : vector<8x32xf32>
    %177 = math.tanh %176 : vector<8x32xf32>
    %178 = arith.mulf %172, %177 : vector<8x32xf32>
    %179 = vector.extract_strided_slice %0 {offsets = [40, 0], sizes = [8, 128], strides = [1, 1]} : vector<64x128xf32> to vector<8x128xf32>
    %cst_34 = arith.constant dense<0.000000e+00> : vector<8x128xf32>
    %180 = tpu.matmul %158, %1, %cst_34 {dimension_numbers = #tpu.dot_dimension_numbers<[1], [0], [0], [1], [0, 0, 1, 1], [], []>} : vector<8x32xf32>, vector<32x128xf32>, vector<8x128xf32> -> vector<8x128xf32>
    %181 = arith.addf %179, %180 : vector<8x128xf32>
    %182 = arith.negf %181 : vector<8x128xf32>
    %183 = math.exp %182 : vector<8x128xf32>
    %cst_35 = arith.constant 1.000000e+00 : f32
    %184 = vector.broadcast %cst_35 : f32 to vector<8x128xf32>
    %185 = arith.addf %184, %183 : vector<8x128xf32>
    %186 = arith.divf %184, %185 : vector<8x128xf32>
    %187 = math.tanh %181 : vector<8x128xf32>
    %188 = vector.extract_strided_slice %186 {offsets = [0, 0], sizes = [8, 32], strides = [1, 1]} : vector<8x128xf32> to vector<8x32xf32>
    %189 = vector.extract_strided_slice %186 {offsets = [0, 32], sizes = [8, 32], strides = [1, 1]} : vector<8x128xf32> to vector<8x32xf32>
    %190 = vector.extract_strided_slice %186 {offsets = [0, 96], sizes = [8, 32], strides = [1, 1]} : vector<8x128xf32> to vector<8x32xf32>
    %191 = vector.extract_strided_slice %187 {offsets = [0, 64], sizes = [8, 32], strides = [1, 1]} : vector<8x128xf32> to vector<8x32xf32>
    %192 = arith.mulf %189, %156 : vector<8x32xf32>
    %193 = arith.mulf %188, %191 : vector<8x32xf32>
    %194 = arith.addf %192, %193 : vector<8x32xf32>
    %195 = math.tanh %194 : vector<8x32xf32>
    %196 = arith.mulf %190, %195 : vector<8x32xf32>
    %cst_36 = arith.constant dense<0.000000e+00> : vector<8x128xf32>
    %197 = tpu.matmul %158, %2, %cst_36 {dimension_numbers = #tpu.dot_dimension_numbers<[1], [0], [0], [1], [0, 0, 1, 1], [], []>} : vector<8x32xf32>, vector<32x128xf32>, vector<8x128xf32> -> vector<8x128xf32>
    %cst_37 = arith.constant dense<0.000000e+00> : vector<8x128xf32>
    %198 = tpu.matmul %178, %3, %cst_37 {dimension_numbers = #tpu.dot_dimension_numbers<[1], [0], [0], [1], [0, 0, 1, 1], [], []>} : vector<8x32xf32>, vector<32x128xf32>, vector<8x128xf32> -> vector<8x128xf32>
    %199 = arith.addf %197, %198 : vector<8x128xf32>
    %200 = vector.broadcast %4 : vector<1x128xf32> to vector<8x128xf32>
    %201 = arith.addf %199, %200 : vector<8x128xf32>
    %202 = arith.negf %201 : vector<8x128xf32>
    %203 = math.exp %202 : vector<8x128xf32>
    %cst_38 = arith.constant 1.000000e+00 : f32
    %204 = vector.broadcast %cst_38 : f32 to vector<8x128xf32>
    %205 = arith.addf %204, %203 : vector<8x128xf32>
    %206 = arith.divf %204, %205 : vector<8x128xf32>
    %207 = math.tanh %201 : vector<8x128xf32>
    %208 = vector.extract_strided_slice %206 {offsets = [0, 0], sizes = [8, 32], strides = [1, 1]} : vector<8x128xf32> to vector<8x32xf32>
    %209 = vector.extract_strided_slice %206 {offsets = [0, 32], sizes = [8, 32], strides = [1, 1]} : vector<8x128xf32> to vector<8x32xf32>
    %210 = vector.extract_strided_slice %206 {offsets = [0, 96], sizes = [8, 32], strides = [1, 1]} : vector<8x128xf32> to vector<8x32xf32>
    %211 = vector.extract_strided_slice %207 {offsets = [0, 64], sizes = [8, 32], strides = [1, 1]} : vector<8x128xf32> to vector<8x32xf32>
    %212 = arith.mulf %209, %176 : vector<8x32xf32>
    %213 = arith.mulf %208, %211 : vector<8x32xf32>
    %214 = arith.addf %212, %213 : vector<8x32xf32>
    %215 = math.tanh %214 : vector<8x32xf32>
    %216 = arith.mulf %210, %215 : vector<8x32xf32>
    %217 = vector.extract_strided_slice %0 {offsets = [48, 0], sizes = [8, 128], strides = [1, 1]} : vector<64x128xf32> to vector<8x128xf32>
    %cst_39 = arith.constant dense<0.000000e+00> : vector<8x128xf32>
    %218 = tpu.matmul %196, %1, %cst_39 {dimension_numbers = #tpu.dot_dimension_numbers<[1], [0], [0], [1], [0, 0, 1, 1], [], []>} : vector<8x32xf32>, vector<32x128xf32>, vector<8x128xf32> -> vector<8x128xf32>
    %219 = arith.addf %217, %218 : vector<8x128xf32>
    %220 = arith.negf %219 : vector<8x128xf32>
    %221 = math.exp %220 : vector<8x128xf32>
    %cst_40 = arith.constant 1.000000e+00 : f32
    %222 = vector.broadcast %cst_40 : f32 to vector<8x128xf32>
    %223 = arith.addf %222, %221 : vector<8x128xf32>
    %224 = arith.divf %222, %223 : vector<8x128xf32>
    %225 = math.tanh %219 : vector<8x128xf32>
    %226 = vector.extract_strided_slice %224 {offsets = [0, 0], sizes = [8, 32], strides = [1, 1]} : vector<8x128xf32> to vector<8x32xf32>
    %227 = vector.extract_strided_slice %224 {offsets = [0, 32], sizes = [8, 32], strides = [1, 1]} : vector<8x128xf32> to vector<8x32xf32>
    %228 = vector.extract_strided_slice %224 {offsets = [0, 96], sizes = [8, 32], strides = [1, 1]} : vector<8x128xf32> to vector<8x32xf32>
    %229 = vector.extract_strided_slice %225 {offsets = [0, 64], sizes = [8, 32], strides = [1, 1]} : vector<8x128xf32> to vector<8x32xf32>
    %230 = arith.mulf %227, %194 : vector<8x32xf32>
    %231 = arith.mulf %226, %229 : vector<8x32xf32>
    %232 = arith.addf %230, %231 : vector<8x32xf32>
    %233 = math.tanh %232 : vector<8x32xf32>
    %234 = arith.mulf %228, %233 : vector<8x32xf32>
    %cst_41 = arith.constant dense<0.000000e+00> : vector<8x128xf32>
    %235 = tpu.matmul %196, %2, %cst_41 {dimension_numbers = #tpu.dot_dimension_numbers<[1], [0], [0], [1], [0, 0, 1, 1], [], []>} : vector<8x32xf32>, vector<32x128xf32>, vector<8x128xf32> -> vector<8x128xf32>
    %cst_42 = arith.constant dense<0.000000e+00> : vector<8x128xf32>
    %236 = tpu.matmul %216, %3, %cst_42 {dimension_numbers = #tpu.dot_dimension_numbers<[1], [0], [0], [1], [0, 0, 1, 1], [], []>} : vector<8x32xf32>, vector<32x128xf32>, vector<8x128xf32> -> vector<8x128xf32>
    %237 = arith.addf %235, %236 : vector<8x128xf32>
    %238 = vector.broadcast %4 : vector<1x128xf32> to vector<8x128xf32>
    %239 = arith.addf %237, %238 : vector<8x128xf32>
    %240 = arith.negf %239 : vector<8x128xf32>
    %241 = math.exp %240 : vector<8x128xf32>
    %cst_43 = arith.constant 1.000000e+00 : f32
    %242 = vector.broadcast %cst_43 : f32 to vector<8x128xf32>
    %243 = arith.addf %242, %241 : vector<8x128xf32>
    %244 = arith.divf %242, %243 : vector<8x128xf32>
    %245 = math.tanh %239 : vector<8x128xf32>
    %246 = vector.extract_strided_slice %244 {offsets = [0, 0], sizes = [8, 32], strides = [1, 1]} : vector<8x128xf32> to vector<8x32xf32>
    %247 = vector.extract_strided_slice %244 {offsets = [0, 32], sizes = [8, 32], strides = [1, 1]} : vector<8x128xf32> to vector<8x32xf32>
    %248 = vector.extract_strided_slice %244 {offsets = [0, 96], sizes = [8, 32], strides = [1, 1]} : vector<8x128xf32> to vector<8x32xf32>
    %249 = vector.extract_strided_slice %245 {offsets = [0, 64], sizes = [8, 32], strides = [1, 1]} : vector<8x128xf32> to vector<8x32xf32>
    %250 = arith.mulf %247, %214 : vector<8x32xf32>
    %251 = arith.mulf %246, %249 : vector<8x32xf32>
    %252 = arith.addf %250, %251 : vector<8x32xf32>
    %253 = math.tanh %252 : vector<8x32xf32>
    %254 = arith.mulf %248, %253 : vector<8x32xf32>
    %255 = vector.extract_strided_slice %0 {offsets = [56, 0], sizes = [8, 128], strides = [1, 1]} : vector<64x128xf32> to vector<8x128xf32>
    %cst_44 = arith.constant dense<0.000000e+00> : vector<8x128xf32>
    %256 = tpu.matmul %234, %1, %cst_44 {dimension_numbers = #tpu.dot_dimension_numbers<[1], [0], [0], [1], [0, 0, 1, 1], [], []>} : vector<8x32xf32>, vector<32x128xf32>, vector<8x128xf32> -> vector<8x128xf32>
    %257 = arith.addf %255, %256 : vector<8x128xf32>
    %258 = arith.negf %257 : vector<8x128xf32>
    %259 = math.exp %258 : vector<8x128xf32>
    %cst_45 = arith.constant 1.000000e+00 : f32
    %260 = vector.broadcast %cst_45 : f32 to vector<8x128xf32>
    %261 = arith.addf %260, %259 : vector<8x128xf32>
    %262 = arith.divf %260, %261 : vector<8x128xf32>
    %263 = math.tanh %257 : vector<8x128xf32>
    %264 = vector.extract_strided_slice %262 {offsets = [0, 0], sizes = [8, 32], strides = [1, 1]} : vector<8x128xf32> to vector<8x32xf32>
    %265 = vector.extract_strided_slice %262 {offsets = [0, 32], sizes = [8, 32], strides = [1, 1]} : vector<8x128xf32> to vector<8x32xf32>
    %266 = vector.extract_strided_slice %262 {offsets = [0, 96], sizes = [8, 32], strides = [1, 1]} : vector<8x128xf32> to vector<8x32xf32>
    %267 = vector.extract_strided_slice %263 {offsets = [0, 64], sizes = [8, 32], strides = [1, 1]} : vector<8x128xf32> to vector<8x32xf32>
    %268 = arith.mulf %265, %232 : vector<8x32xf32>
    %269 = arith.mulf %264, %267 : vector<8x32xf32>
    %270 = arith.addf %268, %269 : vector<8x32xf32>
    %271 = math.tanh %270 : vector<8x32xf32>
    %272 = arith.mulf %266, %271 : vector<8x32xf32>
    %cst_46 = arith.constant dense<0.000000e+00> : vector<8x128xf32>
    %273 = tpu.matmul %234, %2, %cst_46 {dimension_numbers = #tpu.dot_dimension_numbers<[1], [0], [0], [1], [0, 0, 1, 1], [], []>} : vector<8x32xf32>, vector<32x128xf32>, vector<8x128xf32> -> vector<8x128xf32>
    %cst_47 = arith.constant dense<0.000000e+00> : vector<8x128xf32>
    %274 = tpu.matmul %254, %3, %cst_47 {dimension_numbers = #tpu.dot_dimension_numbers<[1], [0], [0], [1], [0, 0, 1, 1], [], []>} : vector<8x32xf32>, vector<32x128xf32>, vector<8x128xf32> -> vector<8x128xf32>
    %275 = arith.addf %273, %274 : vector<8x128xf32>
    %276 = vector.broadcast %4 : vector<1x128xf32> to vector<8x128xf32>
    %277 = arith.addf %275, %276 : vector<8x128xf32>
    %278 = arith.negf %277 : vector<8x128xf32>
    %279 = math.exp %278 : vector<8x128xf32>
    %cst_48 = arith.constant 1.000000e+00 : f32
    %280 = vector.broadcast %cst_48 : f32 to vector<8x128xf32>
    %281 = arith.addf %280, %279 : vector<8x128xf32>
    %282 = arith.divf %280, %281 : vector<8x128xf32>
    %283 = math.tanh %277 : vector<8x128xf32>
    %284 = vector.extract_strided_slice %282 {offsets = [0, 0], sizes = [8, 32], strides = [1, 1]} : vector<8x128xf32> to vector<8x32xf32>
    %285 = vector.extract_strided_slice %282 {offsets = [0, 32], sizes = [8, 32], strides = [1, 1]} : vector<8x128xf32> to vector<8x32xf32>
    %286 = vector.extract_strided_slice %282 {offsets = [0, 96], sizes = [8, 32], strides = [1, 1]} : vector<8x128xf32> to vector<8x32xf32>
    %287 = vector.extract_strided_slice %283 {offsets = [0, 64], sizes = [8, 32], strides = [1, 1]} : vector<8x128xf32> to vector<8x32xf32>
    %288 = arith.mulf %285, %252 : vector<8x32xf32>
    %289 = arith.mulf %284, %287 : vector<8x32xf32>
    %290 = arith.addf %288, %289 : vector<8x32xf32>
    %291 = math.tanh %290 : vector<8x32xf32>
    %292 = arith.mulf %286, %291 : vector<8x32xf32>
    %cst_49 = arith.constant dense<0.000000e+00> : vector<8x128xf32>
    %293 = tpu.matmul %272, %2, %cst_49 {dimension_numbers = #tpu.dot_dimension_numbers<[1], [0], [0], [1], [0, 0, 1, 1], [], []>} : vector<8x32xf32>, vector<32x128xf32>, vector<8x128xf32> -> vector<8x128xf32>
    %cst_50 = arith.constant dense<0.000000e+00> : vector<8x128xf32>
    %294 = tpu.matmul %292, %3, %cst_50 {dimension_numbers = #tpu.dot_dimension_numbers<[1], [0], [0], [1], [0, 0, 1, 1], [], []>} : vector<8x32xf32>, vector<32x128xf32>, vector<8x128xf32> -> vector<8x128xf32>
    %295 = arith.addf %293, %294 : vector<8x128xf32>
    %296 = vector.broadcast %4 : vector<1x128xf32> to vector<8x128xf32>
    %297 = arith.addf %295, %296 : vector<8x128xf32>
    %298 = arith.negf %297 : vector<8x128xf32>
    %299 = math.exp %298 : vector<8x128xf32>
    %cst_51 = arith.constant 1.000000e+00 : f32
    %300 = vector.broadcast %cst_51 : f32 to vector<8x128xf32>
    %301 = arith.addf %300, %299 : vector<8x128xf32>
    %302 = arith.divf %300, %301 : vector<8x128xf32>
    %303 = math.tanh %297 : vector<8x128xf32>
    %304 = vector.extract_strided_slice %302 {offsets = [0, 0], sizes = [8, 32], strides = [1, 1]} : vector<8x128xf32> to vector<8x32xf32>
    %305 = vector.extract_strided_slice %302 {offsets = [0, 32], sizes = [8, 32], strides = [1, 1]} : vector<8x128xf32> to vector<8x32xf32>
    %306 = vector.extract_strided_slice %302 {offsets = [0, 96], sizes = [8, 32], strides = [1, 1]} : vector<8x128xf32> to vector<8x32xf32>
    %307 = vector.extract_strided_slice %303 {offsets = [0, 64], sizes = [8, 32], strides = [1, 1]} : vector<8x128xf32> to vector<8x32xf32>
    %308 = arith.mulf %305, %290 : vector<8x32xf32>
    %309 = arith.mulf %304, %307 : vector<8x32xf32>
    %310 = arith.addf %308, %309 : vector<8x32xf32>
    %311 = math.tanh %310 : vector<8x32xf32>
    %312 = arith.mulf %306, %311 : vector<8x32xf32>
    %c0_52 = arith.constant 0 : index
    %c0_53 = arith.constant 0 : index
    %313 = vector.load %arg5[%c0_52, %c0_53] : memref<32x2xf32, #tpu.memory_space<vmem>>, vector<32x2xf32>
    %cst_54 = arith.constant dense<0.000000e+00> : vector<8x2xf32>
    %314 = tpu.matmul %312, %313, %cst_54 {dimension_numbers = #tpu.dot_dimension_numbers<[1], [0], [0], [1], [0, 0, 1, 1], [], []>} : vector<8x32xf32>, vector<32x2xf32>, vector<8x2xf32> -> vector<8x2xf32>
    %c0_55 = arith.constant 0 : index
    %c0_56 = arith.constant 0 : index
    %315 = vector.load %arg6[%c0_55, %c0_56] : memref<1x2xf32, #tpu.memory_space<vmem>>, vector<1x2xf32>
    %316 = vector.broadcast %315 : vector<1x2xf32> to vector<8x2xf32>
    %317 = arith.addf %314, %316 : vector<8x2xf32>
    %c0_57 = arith.constant 0 : index
    %c0_58 = arith.constant 0 : index
    %318 = vector.load %arg7[%c0_57, %c0_58] : memref<8x2xf32, #tpu.memory_space<vmem>>, vector<8x2xf32>
    tpu.vector_store %arg7[%c0_57, %c0_58], %317 {strides = array<i32>} : memref<8x2xf32, #tpu.memory_space<vmem>>, vector<8x2xf32>,
    return
  }
}

</mosaic_0001>

<llo_original>
// kernel: tpu_custom_call.1
$region0: #{tpu_custom_call.1}
  #allocation0 [shape = 'u32[]', space=smem, size = 0x4, offset = 0x4, fixed_abs, tag = 'smem constant byte address 0x4 - core index']
  #allocation1 [shape = 'u32[144,128]{1,0:T(1,128)}', space=vmem, size = 0x12000, scoped, tag = 'internal scratch']
  %s0 = inlined_call_operand.hbm [shape: f32[64,128], index: 0, kind: input, shape index: {}]
  %s1 = inlined_call_operand.vmem [shape: f32[32,128], index: 1, kind: input, shape index: {}]
  %s2 = inlined_call_operand.hbm [shape: f32[32,128], index: 2, kind: input, shape index: {}]
  %s3 = inlined_call_operand.hbm [shape: f32[32,128], index: 3, kind: input, shape index: {}]
  %s4 = inlined_call_operand.vmem [shape: f32[1,128], index: 4, kind: input, shape index: {}]
  %s5 = inlined_call_operand.vmem [shape: f32[32,2], index: 5, kind: input, shape index: {}]
  %s6 = inlined_call_operand.vmem [shape: f32[1,2], index: 6, kind: input, shape index: {}]
  %s7 = inlined_call_operand.vmem [shape: f32[8,2], index: 7, kind: output, shape index: {}]
  %s8 = sld [smem:[#allocation0]]
  $region50: #{tpu_custom_call.1} parent=0
    _
  %s10 = ssub.s32 1, %s8
  %s11 = scalar_select 0, %s10, %s8
  $region1: #{tpu_custom_call.1} parent=0
    #allocation2 [shape = 'u8[32768]{0}', space=vmem, size = 0x8000, scoped, tag = 'input window, operand 0, single buffered']
    #allocation3 [shape = 's32[1]{0}', space=sflag, size = 0x4, scoped, tag = 'scoped memory for tpu_custom_call.1']
    #allocation4 [shape = 'u8[16384]{0}', space=vmem, size = 0x4000, scoped, tag = 'input window, operand 2, single buffered']
    #allocation5 [shape = 's32[1]{0}', space=sflag, size = 0x4, scoped, tag = 'scoped memory for tpu_custom_call.1']
    #allocation6 [shape = 'u8[16384]{0}', space=vmem, size = 0x4000, scoped, tag = 'input window, operand 3, single buffered']
    %12 = vsyncpa [#allocation3], 0
    %13 = vsyncpa [#allocation5], 0
    // Predicated region
    $region2: #{tpu_custom_call.1} parent=1 // pred_check
      _
    $region3: #{tpu_custom_call.1} parent=1 // pred_check_branch
      %15 = sbr.rel (0) target = $region5
    $region4: #{tpu_custom_call.1} parent=1 // pred_region
      %s17 = ssub.s32 1024, 1024
      %18 = vsyncadd [#allocation3], %s17
      %s19 = sshll.u32 [#allocation2], 4
      %s20 = int_to_ptr.vmem [resolvable:$true] %s19
      %25 = dma.hbm_to_vmem [thread:$0]  %s0, 1024, %s20, [#allocation3], 128, 128, 8
    $region5: #{tpu_custom_call.1} parent=1 // pred_fallthru
      _
    // Predicated region
    $region6: #{tpu_custom_call.1} parent=1 // pred_check
      _
    $region7: #{tpu_custom_call.1} parent=1 // pred_check_branch
      %27 = sbr.rel (0) target = $region9
    $region8: #{tpu_custom_call.1} parent=1 // pred_region
      _
    $region9: #{tpu_custom_call.1} parent=1 // pred_fallthru
      _
    // Predicated region
    $region10: #{tpu_custom_call.1} parent=1 // pred_check
      _
    $region11: #{tpu_custom_call.1} parent=1 // pred_check_branch
      %29 = sbr.rel (0) target = $region13
    $region12: #{tpu_custom_call.1} parent=1 // pred_region
      %s31 = ssub.s32 512, 512
      %32 = vsyncadd [#allocation5], %s31
      %s33 = sshll.u32 [#allocation4], 4
      %s34 = int_to_ptr.vmem [resolvable:$true] %s33
      %39 = dma.hbm_to_vmem [thread:$0]  %s2, 512, %s34, [#allocation5], 128, 128, 8
    $region13: #{tpu_custom_call.1} parent=1 // pred_fallthru
      _
    // Predicated region
    $region14: #{tpu_custom_call.1} parent=1 // pred_check
      _
    $region15: #{tpu_custom_call.1} parent=1 // pred_check_branch
      %41 = sbr.rel (0) target = $region17
    $region16: #{tpu_custom_call.1} parent=1 // pred_region
      %s43 = ssub.s32 512, 512
      %44 = vsyncadd [#allocation5], %s43
      %s45 = sshll.u32 [#allocation6], 4
      %s46 = int_to_ptr.vmem [resolvable:$true] %s45
      %51 = dma.hbm_to_vmem [thread:$0]  %s3, 512, %s46, [#allocation5], 128, 128, 8
    $region17: #{tpu_custom_call.1} parent=1 // pred_fallthru
      _
    // Predicated region
    $region18: #{tpu_custom_call.1} parent=1 // pred_check
      _
    $region19: #{tpu_custom_call.1} parent=1 // pred_check_branch
      %53 = sbr.rel (0) target = $region21
    $region20: #{tpu_custom_call.1} parent=1 // pred_region
      _
    $region21: #{tpu_custom_call.1} parent=1 // pred_fallthru
      _
    // Predicated region
    $region22: #{tpu_custom_call.1} parent=1 // pred_check
      _
    $region23: #{tpu_custom_call.1} parent=1 // pred_check_branch
      %55 = sbr.rel (0) target = $region25
    $region24: #{tpu_custom_call.1} parent=1 // pred_region
      _
    $region25: #{tpu_custom_call.1} parent=1 // pred_fallthru
      _
    // Predicated region
    $region26: #{tpu_custom_call.1} parent=1 // pred_check
      _
    $region27: #{tpu_custom_call.1} parent=1 // pred_check_branch
      %57 = sbr.rel (0) target = $region29
    $region28: #{tpu_custom_call.1} parent=1 // pred_region
      _
    $region29: #{tpu_custom_call.1} parent=1 // pred_fallthru
      _
    // Predicated region
    $region30: #{tpu_custom_call.1} parent=1 // pred_check
      _
    $region31: #{tpu_custom_call.1} parent=1 // pred_check_branch
      %59 = sbr.rel (0) target = $region33
    $region32: #{tpu_custom_call.1} parent=1 // pred_region
      %60 = dma.done [#allocation3], 1024
    $region33: #{tpu_custom_call.1} parent=1 // pred_fallthru
      _
    // Predicated region
    $region34: #{tpu_custom_call.1} parent=1 // pred_check
      _
    $region35: #{tpu_custom_call.1} parent=1 // pred_check_branch
      %62 = sbr.rel (0) target = $region37
    $region36: #{tpu_custom_call.1} parent=1 // pred_region
      %63 = dma.done [#allocation5], 512
    $region37: #{tpu_custom_call.1} parent=1 // pred_fallthru
      _
    // Predicated region
    $region38: #{tpu_custom_call.1} parent=1 // pred_check
      _
    $region39: #{tpu_custom_call.1} parent=1 // pred_check_branch
      %65 = sbr.rel (0) target = $region41
    $region40: #{tpu_custom_call.1} parent=1 // pred_region
      %66 = dma.done [#allocation5], 512
    $region41: #{tpu_custom_call.1} parent=1 // pred_fallthru
      _
    %v67 = vld [vmem:[#allocation2] sm:$0xff]
    %v68 = vld [vmem:[#allocation2 + $0x8] sm:$0xff]
    %v69 = vld [vmem:[#allocation2 + $0x10] sm:$0xff]
    %v70 = vld [vmem:[#allocation2 + $0x18] sm:$0xff]
    %v71 = vld [vmem:[#allocation2 + $0x20] sm:$0xff]
    %v72 = vld [vmem:[#allocation2 + $0x28] sm:$0xff]
    %v73 = vld [vmem:[#allocation2 + $0x30] sm:$0xff]
    %v74 = vld [vmem:[#allocation2 + $0x38] sm:$0xff]
    %v75 = vld [vmem:[%s1] sm:$0xff]
    %v76 = vld [vmem:[%s1 + $0x8] sm:$0xff]
    %v77 = vld [vmem:[%s1 + $0x10] sm:$0xff]
    %v78 = vld [vmem:[%s1 + $0x18] sm:$0xff]
    %v79 = vld [vmem:[#allocation4] sm:$0xff]
    %v80 = vld [vmem:[#allocation4 + $0x8] sm:$0xff]
    %v81 = vld [vmem:[#allocation4 + $0x10] sm:$0xff]
    %v82 = vld [vmem:[#allocation4 + $0x18] sm:$0xff]
    %v83 = vld [vmem:[#allocation6] sm:$0xff]
    %v84 = vld [vmem:[#allocation6 + $0x8] sm:$0xff]
    %v85 = vld [vmem:[#allocation6 + $0x10] sm:$0xff]
    %v86 = vld [vmem:[#allocation6 + $0x18] sm:$0xff]
    %v87 = vld [vmem:[%s4] sm:$0x1]
    %vm88 = vcmask 261120
    %v90 = vsel %vm88, 0.0, 0
    %92 = vmatprep.subr.mxu0 0.0
    %93 = vmatpush1.msra.mxu0 %v75
    %94 = vmatprep.subr.mxu0 0.0
    %95 = vmatpush1.msra.mxu0 %v76
    %96 = vmatprep.subr.mxu0 0.0
    %97 = vmatpush1.msra.mxu0 %v77
    %98 = vmatprep.subr.mxu0 0.0
    %99 = vmatpush1.msra.mxu0 %v78
    %100 = vmatprep.subr.mxu0 0.0
    %101 = vmatpush1.msra.mxu0 0.0
    %102 = vmatprep.subr.mxu0 0.0
    %103 = vmatpush1.msra.mxu0 0.0
    %104 = vmatprep.subr.mxu0 0.0
    %105 = vmatpush1.msra.mxu0 0.0
    %106 = vmatprep.subr.mxu0 0.0
    %107 = vmatpush1.msra.mxu0 0.0
    %108 = vmatprep.subr.mxu0 0.0
    %109 = vmatpush1.msra.mxu0 0.0
    %110 = vmatprep.subr.mxu0 0.0
    %111 = vmatpush1.msra.mxu0 0.0
    %112 = vmatprep.subr.mxu0 0.0
    %113 = vmatpush1.msra.mxu0 0.0
    %114 = vmatprep.subr.mxu0 0.0
    %115 = vmatpush1.msra.mxu0 0.0
    %116 = vmatprep.subr.mxu0 0.0
    %117 = vmatpush1.msra.mxu0 0.0
    %118 = vmatprep.subr.mxu0 0.0
    %119 = vmatpush1.msra.mxu0 0.0
    %120 = vmatprep.subr.mxu0 0.0
    %121 = vmatpush1.msra.mxu0 0.0
    %122 = vmatprep.subr.mxu0 0.0
    %123 = vmatpush1.msra.mxu0 0.0
    %124 = vmatprep.subr.mxu0 0.0
    %125 = vmatpush1.msra.mxu0 0.0
    %126 = vmatprep.subr.mxu0 0.0
    %127 = vmatpush1.msra.mxu0 0.0
    %128 = vmatprep.subr.mxu0 0.0
    %129 = vmatpush1.msra.mxu0 0.0
    %130 = vmatprep.subr.mxu0 0.0
    %131 = vmatpush1.msra.mxu0 0.0
    %132 = vmatprep.subr.mxu0 0.0
    %133 = vmatpush1.msra.mxu0 0.0
    %134 = vmatprep.subr.mxu0 0.0
    %135 = vmatpush1.msra.mxu0 0.0
    %136 = vmatprep.subr.mxu0 0.0
    %137 = vmatpush1.msra.mxu0 0.0
    %138 = vmatprep.subr.mxu0 0.0
    %139 = vmatpush1.msra.mxu0 0.0
    %140 = vmatprep.subr.mxu0 0.0
    %141 = vmatpush1.msra.mxu0 0.0
    %142 = vmatprep.subr.mxu0 0.0
    %143 = vmatpush1.msra.mxu0 0.0
    %144 = vmatprep.subr.mxu0 0.0
    %145 = vmatpush1.msra.mxu0 0.0
    %146 = vmatprep.subr.mxu0 0.0
    %147 = vmatpush1.msra.mxu0 0.0
    %148 = vmatprep.subr.mxu0 0.0
    %149 = vmatpush1.msra.mxu0 0.0
    %150 = vmatprep.subr.mxu0 0.0
    %151 = vmatpush1.msra.mxu0 0.0
    %152 = vmatprep.subr.mxu0 0.0
    %153 = vmatpush1.msra.mxu0 0.0
    %154 = vmatprep.subr.mxu0 0.0
    %155 = vmatpush1.msra.mxu0 0.0
    %156 = vmatprep.mubr.f32.mxu0 0.0
    %157 = vmatmul.mubr.f32.gmra.mrb[0].mxu0 %v90
    %v158 = vpop.f32.mrb[0].mxu0
    %v159 = vadd.f32 0.0, %v158
    %v160 = vpop.f32.mrb[0].mxu0
    %161 = vdwg.mxu0
    %v162 = vadd.f32 %v67, %v159
    %v163 = vxor.u32 %v162, 2147483648
    %v164 = vmul.f32 %v163, 1.442695
    %v165 = vpow.pop %v164
    %v166 = vadd.f32 %v165, 1.0
    %v167 = vrcp.pop %v166
    %v168 = vmul.f32 1.0, %v167
    %v169 = vtanh.pop %v162
    %v170 = vmul.f32 %v168, 0.0
    %172 = vrot.lane.b32.xlu0 %v169, 64
    %v173 = vpop.permute.xlu0 %172
    %v175 = vmul.f32 %v168, %v173
    %177 = vrot.lane.b32.xlu0 %v175, 32
    %v178 = vpop.permute.xlu0 %177
    %v180 = vadd.f32 %v170, %v178
    %v181 = vtanh.pop %v180
    %183 = vrot.lane.b32.xlu0 %v181, 64
    %v184 = vpop.permute.xlu0 %183
    %v186 = vmul.f32 %v168, %v184
    %188 = vrot.lane.b32.xlu0 %v186, 32
    %v189 = vpop.permute.xlu0 %188
    %v190 = vsel %vm88, %v189, 0
    %192 = vmatprep.subr.mxu0 0.0
    %193 = vmatpush1.msra.mxu0 %v75
    %194 = vmatprep.subr.mxu0 0.0
    %195 = vmatpush1.msra.mxu0 %v76
    %196 = vmatprep.subr.mxu0 0.0
    %197 = vmatpush1.msra.mxu0 %v77
    %198 = vmatprep.subr.mxu0 0.0
    %199 = vmatpush1.msra.mxu0 %v78
    %200 = vmatprep.subr.mxu0 0.0
    %201 = vmatpush1.msra.mxu0 0.0
    %202 = vmatprep.subr.mxu0 0.0
    %203 = vmatpush1.msra.mxu0 0.0
    %204 = vmatprep.subr.mxu0 0.0
    %205 = vmatpush1.msra.mxu0 0.0
    %206 = vmatprep.subr.mxu0 0.0
    %207 = vmatpush1.msra.mxu0 0.0
    %208 = vmatprep.subr.mxu0 0.0
    %209 = vmatpush1.msra.mxu0 0.0
    %210 = vmatprep.subr.mxu0 0.0
    %211 = vmatpush1.msra.mxu0 0.0
    %212 = vmatprep.subr.mxu0 0.0
    %213 = vmatpush1.msra.mxu0 0.0
    %214 = vmatprep.subr.mxu0 0.0
    %215 = vmatpush1.msra.mxu0 0.0
    %216 = vmatprep.subr.mxu0 0.0
    %217 = vmatpush1.msra.mxu0 0.0
    %218 = vmatprep.subr.mxu0 0.0
    %219 = vmatpush1.msra.mxu0 0.0
    %220 = vmatprep.subr.mxu0 0.0
    %221 = vmatpush1.msra.mxu0 0.0
    %222 = vmatprep.subr.mxu0 0.0
    %223 = vmatpush1.msra.mxu0 0.0
    %224 = vmatprep.subr.mxu0 0.0
    %225 = vmatpush1.msra.mxu0 0.0
    %226 = vmatprep.subr.mxu0 0.0
    %227 = vmatpush1.msra.mxu0 0.0
    %228 = vmatprep.subr.mxu0 0.0
    %229 = vmatpush1.msra.mxu0 0.0
    %230 = vmatprep.subr.mxu0 0.0
    %231 = vmatpush1.msra.mxu0 0.0
    %232 = vmatprep.subr.mxu0 0.0
    %233 = vmatpush1.msra.mxu0 0.0
    %234 = vmatprep.subr.mxu0 0.0
    %235 = vmatpush1.msra.mxu0 0.0
    %236 = vmatprep.subr.mxu0 0.0
    %237 = vmatpush1.msra.mxu0 0.0
    %238 = vmatprep.subr.mxu0 0.0
    %239 = vmatpush1.msra.mxu0 0.0
    %240 = vmatprep.subr.mxu0 0.0
    %241 = vmatpush1.msra.mxu0 0.0
    %242 = vmatprep.subr.mxu0 0.0
    %243 = vmatpush1.msra.mxu0 0.0
    %244 = vmatprep.subr.mxu0 0.0
    %245 = vmatpush1.msra.mxu0 0.0
    %246 = vmatprep.subr.mxu0 0.0
    %247 = vmatpush1.msra.mxu0 0.0
    %248 = vmatprep.subr.mxu0 0.0
    %249 = vmatpush1.msra.mxu0 0.0
    %250 = vmatprep.subr.mxu0 0.0
    %251 = vmatpush1.msra.mxu0 0.0
    %252 = vmatprep.subr.mxu0 0.0
    %253 = vmatpush1.msra.mxu0 0.0
    %254 = vmatprep.subr.mxu0 0.0
    %255 = vmatpush1.msra.mxu0 0.0
    %256 = vmatprep.mubr.f32.mxu0 0.0
    %257 = vmatmul.mubr.f32.gmra.mrb[0].mxu0 %v190
    %v258 = vpop.f32.mrb[0].mxu0
    %v259 = vadd.f32 0.0, %v258
    %v260 = vpop.f32.mrb[0].mxu0
    %261 = vdwg.mxu0
    %v262 = vadd.f32 %v68, %v259
    %v263 = vxor.u32 %v262, 2147483648
    %v264 = vmul.f32 %v263, 1.442695
    %v265 = vpow.pop %v264
    %v266 = vadd.f32 %v265, 1.0
    %v267 = vrcp.pop %v266
    %v268 = vmul.f32 1.0, %v267
    %v269 = vtanh.pop %v262
    %v270 = vmul.f32 %v268, %v180
    %272 = vrot.lane.b32.xlu0 %v269, 64
    %v273 = vpop.permute.xlu0 %272
    %v275 = vmul.f32 %v268, %v273
    %277 = vrot.lane.b32.xlu0 %v275, 32
    %v278 = vpop.permute.xlu0 %277
    %v280 = vadd.f32 %v270, %v278
    %v281 = vtanh.pop %v280
    %283 = vrot.lane.b32.xlu0 %v281, 64
    %v284 = vpop.permute.xlu0 %283
    %v286 = vmul.f32 %v268, %v284
    %287 = vmatprep.subr.mxu0 0.0
    %288 = vmatpush1.msra.mxu0 %v83
    %289 = vmatprep.subr.mxu0 0.0
    %290 = vmatpush1.msra.mxu0 %v84
    %291 = vmatprep.subr.mxu0 0.0
    %292 = vmatpush1.msra.mxu0 %v85
    %293 = vmatprep.subr.mxu0 0.0
    %294 = vmatpush1.msra.mxu0 %v86
    %295 = vmatprep.subr.mxu0 0.0
    %296 = vmatpush1.msra.mxu0 0.0
    %297 = vmatprep.subr.mxu0 0.0
    %298 = vmatpush1.msra.mxu0 0.0
    %299 = vmatprep.subr.mxu0 0.0
    %300 = vmatpush1.msra.mxu0 0.0
    %301 = vmatprep.subr.mxu0 0.0
    %302 = vmatpush1.msra.mxu0 0.0
    %303 = vmatprep.subr.mxu0 0.0
    %304 = vmatpush1.msra.mxu0 0.0
    %305 = vmatprep.subr.mxu0 0.0
    %306 = vmatpush1.msra.mxu0 0.0
    %307 = vmatprep.subr.mxu0 0.0
    %308 = vmatpush1.msra.mxu0 0.0
    %309 = vmatprep.subr.mxu0 0.0
    %310 = vmatpush1.msra.mxu0 0.0
    %311 = vmatprep.subr.mxu0 0.0
    %312 = vmatpush1.msra.mxu0 0.0
    %313 = vmatprep.subr.mxu0 0.0
    %314 = vmatpush1.msra.mxu0 0.0
    %315 = vmatprep.subr.mxu0 0.0
    %316 = vmatpush1.msra.mxu0 0.0
    %317 = vmatprep.subr.mxu0 0.0
    %318 = vmatpush1.msra.mxu0 0.0
    %319 = vmatprep.subr.mxu0 0.0
    %320 = vmatpush1.msra.mxu0 0.0
    %321 = vmatprep.subr.mxu0 0.0
    %322 = vmatpush1.msra.mxu0 0.0
    %323 = vmatprep.subr.mxu0 0.0
    %324 = vmatpush1.msra.mxu0 0.0
    %325 = vmatprep.subr.mxu0 0.0
    %326 = vmatpush1.msra.mxu0 0.0
    %327 = vmatprep.subr.mxu0 0.0
    %328 = vmatpush1.msra.mxu0 0.0
    %329 = vmatprep.subr.mxu0 0.0
    %330 = vmatpush1.msra.mxu0 0.0
    %331 = vmatprep.subr.mxu0 0.0
    %332 = vmatpush1.msra.mxu0 0.0
    %333 = vmatprep.subr.mxu0 0.0
    %334 = vmatpush1.msra.mxu0 0.0
    %335 = vmatprep.subr.mxu0 0.0
    %336 = vmatpush1.msra.mxu0 0.0
    %337 = vmatprep.subr.mxu0 0.0
    %338 = vmatpush1.msra.mxu0 0.0
    %339 = vmatprep.subr.mxu0 0.0
    %340 = vmatpush1.msra.mxu0 0.0
    %341 = vmatprep.subr.mxu0 0.0
    %342 = vmatpush1.msra.mxu0 0.0
    %343 = vmatprep.subr.mxu0 0.0
    %344 = vmatpush1.msra.mxu0 0.0
    %345 = vmatprep.subr.mxu0 0.0
    %346 = vmatpush1.msra.mxu0 0.0
    %347 = vmatprep.subr.mxu0 0.0
    %348 = vmatpush1.msra.mxu0 0.0
    %349 = vmatprep.subr.mxu0 0.0
    %350 = vmatpush1.msra.mxu0 0.0
    %351 = vmatprep.mubr.f32.mxu0 0.0
    %352 = vmatmul.mubr.f32.gmra.mrb[0].mxu0 %v90
    %v353 = vpop.f32.mrb[0].mxu0
    %v354 = vadd.f32 0.0, %v353
    %v355 = vpop.f32.mrb[0].mxu0
    %356 = vdwg.mxu0
    %357 = vmatprep.subr.mxu0 0.0
    %358 = vmatpush1.msra.mxu0 %v79
    %359 = vmatprep.subr.mxu0 0.0
    %360 = vmatpush1.msra.mxu0 %v80
    %361 = vmatprep.subr.mxu0 0.0
    %362 = vmatpush1.msra.mxu0 %v81
    %363 = vmatprep.subr.mxu0 0.0
    %364 = vmatpush1.msra.mxu0 %v82
    %365 = vmatprep.subr.mxu0 0.0
    %366 = vmatpush1.msra.mxu0 0.0
    %367 = vmatprep.subr.mxu0 0.0
    %368 = vmatpush1.msra.mxu0 0.0
    %369 = vmatprep.subr.mxu0 0.0
    %370 = vmatpush1.msra.mxu0 0.0
    %371 = vmatprep.subr.mxu0 0.0
    %372 = vmatpush1.msra.mxu0 0.0
    %373 = vmatprep.subr.mxu0 0.0
    %374 = vmatpush1.msra.mxu0 0.0
    %375 = vmatprep.subr.mxu0 0.0
    %376 = vmatpush1.msra.mxu0 0.0
    %377 = vmatprep.subr.mxu0 0.0
    %378 = vmatpush1.msra.mxu0 0.0
    %379 = vmatprep.subr.mxu0 0.0
    %380 = vmatpush1.msra.mxu0 0.0
    %381 = vmatprep.subr.mxu0 0.0
    %382 = vmatpush1.msra.mxu0 0.0
    %383 = vmatprep.subr.mxu0 0.0
    %384 = vmatpush1.msra.mxu0 0.0
    %385 = vmatprep.subr.mxu0 0.0
    %386 = vmatpush1.msra.mxu0 0.0
    %387 = vmatprep.subr.mxu0 0.0
    %388 = vmatpush1.msra.mxu0 0.0
    %389 = vmatprep.subr.mxu0 0.0
    %390 = vmatpush1.msra.mxu0 0.0
    %391 = vmatprep.subr.mxu0 0.0
    %392 = vmatpush1.msra.mxu0 0.0
    %393 = vmatprep.subr.mxu0 0.0
    %394 = vmatpush1.msra.mxu0 0.0
    %395 = vmatprep.subr.mxu0 0.0
    %396 = vmatpush1.msra.mxu0 0.0
    %397 = vmatprep.subr.mxu0 0.0
    %398 = vmatpush1.msra.mxu0 0.0
    %399 = vmatprep.subr.mxu0 0.0
    %400 = vmatpush1.msra.mxu0 0.0
    %401 = vmatprep.subr.mxu0 0.0
    %402 = vmatpush1.msra.mxu0 0.0
    %403 = vmatprep.subr.mxu0 0.0
    %404 = vmatpush1.msra.mxu0 0.0
    %405 = vmatprep.subr.mxu0 0.0
    %406 = vmatpush1.msra.mxu0 0.0
    %407 = vmatprep.subr.mxu0 0.0
    %408 = vmatpush1.msra.mxu0 0.0
    %409 = vmatprep.subr.mxu0 0.0
    %410 = vmatpush1.msra.mxu0 0.0
    %411 = vmatprep.subr.mxu0 0.0
    %412 = vmatpush1.msra.mxu0 0.0
    %413 = vmatprep.subr.mxu0 0.0
    %414 = vmatpush1.msra.mxu0 0.0
    %415 = vmatprep.subr.mxu0 0.0
    %416 = vmatpush1.msra.mxu0 0.0
    %417 = vmatprep.subr.mxu0 0.0
    %418 = vmatpush1.msra.mxu0 0.0
    %419 = vmatprep.subr.mxu0 0.0
    %420 = vmatpush1.msra.mxu0 0.0
    %421 = vmatprep.mubr.f32.mxu0 0.0
    %422 = vmatmul.mubr.f32.gmra.mrb[0].mxu0 %v190
    %v423 = vpop.f32.mrb[0].mxu0
    %v424 = vadd.f32 %v354, %v423
    %v425 = vpop.f32.mrb[0].mxu0
    %426 = vdwg.mxu0
    %v428 = vlaneseq
    %v429 = vshrl.u32 %v428, 7
    %v430 = vsub.s32 0, %v429
    %v431 = vrot.slane %v87, %v430
    %v433 = vadd.f32 %v424, %v431
    %v434 = vxor.u32 %v433, 2147483648
    %v435 = vmul.f32 %v434, 1.442695
    %v436 = vpow.pop %v435
    %v437 = vadd.f32 %v436, 1.0
    %v438 = vrcp.pop %v437
    %v439 = vmul.f32 1.0, %v438
    %v440 = vtanh.pop %v433
    %v441 = vmul.f32 %v439, 0.0
    %443 = vrot.lane.b32.xlu0 %v440, 64
    %v444 = vpop.permute.xlu0 %443
    %v446 = vmul.f32 %v439, %v444
    %448 = vrot.lane.b32.xlu0 %v446, 32
    %v449 = vpop.permute.xlu0 %448
    %v451 = vadd.f32 %v441, %v449
    %v452 = vtanh.pop %v451
    %454 = vrot.lane.b32.xlu0 %v452, 64
    %v455 = vpop.permute.xlu0 %454
    %v457 = vmul.f32 %v439, %v455
    %459 = vrot.lane.b32.xlu0 %v286, 32
    %v460 = vpop.permute.xlu0 %459
    %v461 = vsel %vm88, %v460, 0
    %463 = vmatprep.subr.mxu0 0.0
    %464 = vmatpush1.msra.mxu0 %v75
    %465 = vmatprep.subr.mxu0 0.0
    %466 = vmatpush1.msra.mxu0 %v76
    %467 = vmatprep.subr.mxu0 0.0
    %468 = vmatpush1.msra.mxu0 %v77
    %469 = vmatprep.subr.mxu0 0.0
    %470 = vmatpush1.msra.mxu0 %v78
    %471 = vmatprep.subr.mxu0 0.0
    %472 = vmatpush1.msra.mxu0 0.0
    %473 = vmatprep.subr.mxu0 0.0
    %474 = vmatpush1.msra.mxu0 0.0
    %475 = vmatprep.subr.mxu0 0.0
    %476 = vmatpush1.msra.mxu0 0.0
    %477 = vmatprep.subr.mxu0 0.0
    %478 = vmatpush1.msra.mxu0 0.0
    %479 = vmatprep.subr.mxu0 0.0
    %480 = vmatpush1.msra.mxu0 0.0
    %481 = vmatprep.subr.mxu0 0.0
    %482 = vmatpush1.msra.mxu0 0.0
    %483 = vmatprep.subr.mxu0 0.0
    %484 = vmatpush1.msra.mxu0 0.0
    %485 = vmatprep.subr.mxu0 0.0
    %486 = vmatpush1.msra.mxu0 0.0
    %487 = vmatprep.subr.mxu0 0.0
    %488 = vmatpush1.msra.mxu0 0.0
    %489 = vmatprep.subr.mxu0 0.0
    %490 = vmatpush1.msra.mxu0 0.0
    %491 = vmatprep.subr.mxu0 0.0
    %492 = vmatpush1.msra.mxu0 0.0
    %493 = vmatprep.subr.mxu0 0.0
    %494 = vmatpush1.msra.mxu0 0.0
    %495 = vmatprep.subr.mxu0 0.0
    %496 = vmatpush1.msra.mxu0 0.0
    %497 = vmatprep.subr.mxu0 0.0
    %498 = vmatpush1.msra.mxu0 0.0
    %499 = vmatprep.subr.mxu0 0.0
    %500 = vmatpush1.msra.mxu0 0.0
    %501 = vmatprep.subr.mxu0 0.0
    %502 = vmatpush1.msra.mxu0 0.0
    %503 = vmatprep.subr.mxu0 0.0
    %504 = vmatpush1.msra.mxu0 0.0
    %505 = vmatprep.subr.mxu0 0.0
    %506 = vmatpush1.msra.mxu0 0.0
    %507 = vmatprep.subr.mxu0 0.0
    %508 = vmatpush1.msra.mxu0 0.0
    %509 = vmatprep.subr.mxu0 0.0
    %510 = vmatpush1.msra.mxu0 0.0
    %511 = vmatprep.subr.mxu0 0.0
    %512 = vmatpush1.msra.mxu0 0.0
    %513 = vmatprep.subr.mxu0 0.0
    %514 = vmatpush1.msra.mxu0 0.0
    %515 = vmatprep.subr.mxu0 0.0
    %516 = vmatpush1.msra.mxu0 0.0
    %517 = vmatprep.subr.mxu0 0.0
    %518 = vmatpush1.msra.mxu0 0.0
    %519 = vmatprep.subr.mxu0 0.0
    %520 = vmatpush1.msra.mxu0 0.0
    %521 = vmatprep.subr.mxu0 0.0
    %522 = vmatpush1.msra.mxu0 0.0
    %523 = vmatprep.subr.mxu0 0.0
    %524 = vmatpush1.msra.mxu0 0.0
    %525 = vmatprep.subr.mxu0 0.0
    %526 = vmatpush1.msra.mxu0 0.0
    %527 = vmatprep.mubr.f32.mxu0 0.0
    %528 = vmatmul.mubr.f32.gmra.mrb[0].mxu0 %v461
    %v529 = vpop.f32.mrb[0].mxu0
    %v530 = vadd.f32 0.0, %v529
    %v531 = vpop.f32.mrb[0].mxu0
    %532 = vdwg.mxu0
    %v533 = vadd.f32 %v69, %v530
    %v534 = vxor.u32 %v533, 2147483648
    %v535 = vmul.f32 %v534, 1.442695
    %v536 = vpow.pop %v535
    %v537 = vadd.f32 %v536, 1.0
    %v538 = vrcp.pop %v537
    %v539 = vmul.f32 1.0, %v538
    %v540 = vtanh.pop %v533
    %v541 = vmul.f32 %v539, %v280
    %543 = vrot.lane.b32.xlu0 %v540, 64
    %v544 = vpop.permute.xlu0 %543
    %v546 = vmul.f32 %v539, %v544
    %548 = vrot.lane.b32.xlu0 %v546, 32
    %v549 = vpop.permute.xlu0 %548
    %v551 = vadd.f32 %v541, %v549
    %v552 = vtanh.pop %v551
    %554 = vrot.lane.b32.xlu0 %v552, 64
    %v555 = vpop.permute.xlu0 %554
    %v557 = vmul.f32 %v539, %v555
    %559 = vrot.lane.b32.xlu0 %v457, 32
    %v560 = vpop.permute.xlu0 %559
    %v561 = vsel %vm88, %v560, 0
    %563 = vmatprep.subr.mxu0 0.0
    %564 = vmatpush1.msra.mxu0 %v83
    %565 = vmatprep.subr.mxu0 0.0
    %566 = vmatpush1.msra.mxu0 %v84
    %567 = vmatprep.subr.mxu0 0.0
    %568 = vmatpush1.msra.mxu0 %v85
    %569 = vmatprep.subr.mxu0 0.0
    %570 = vmatpush1.msra.mxu0 %v86
    %571 = vmatprep.subr.mxu0 0.0
    %572 = vmatpush1.msra.mxu0 0.0
    %573 = vmatprep.subr.mxu0 0.0
    %574 = vmatpush1.msra.mxu0 0.0
    %575 = vmatprep.subr.mxu0 0.0
    %576 = vmatpush1.msra.mxu0 0.0
    %577 = vmatprep.subr.mxu0 0.0
    %578 = vmatpush1.msra.mxu0 0.0
    %579 = vmatprep.subr.mxu0 0.0
    %580 = vmatpush1.msra.mxu0 0.0
    %581 = vmatprep.subr.mxu0 0.0
    %582 = vmatpush1.msra.mxu0 0.0
    %583 = vmatprep.subr.mxu0 0.0
    %584 = vmatpush1.msra.mxu0 0.0
    %585 = vmatprep.subr.mxu0 0.0
    %586 = vmatpush1.msra.mxu0 0.0
    %587 = vmatprep.subr.mxu0 0.0
    %588 = vmatpush1.msra.mxu0 0.0
    %589 = vmatprep.subr.mxu0 0.0
    %590 = vmatpush1.msra.mxu0 0.0
    %591 = vmatprep.subr.mxu0 0.0
    %592 = vmatpush1.msra.mxu0 0.0
    %593 = vmatprep.subr.mxu0 0.0
    %594 = vmatpush1.msra.mxu0 0.0
    %595 = vmatprep.subr.mxu0 0.0
    %596 = vmatpush1.msra.mxu0 0.0
    %597 = vmatprep.subr.mxu0 0.0
    %598 = vmatpush1.msra.mxu0 0.0
    %599 = vmatprep.subr.mxu0 0.0
    %600 = vmatpush1.msra.mxu0 0.0
    %601 = vmatprep.subr.mxu0 0.0
    %602 = vmatpush1.msra.mxu0 0.0
    %603 = vmatprep.subr.mxu0 0.0
    %604 = vmatpush1.msra.mxu0 0.0
    %605 = vmatprep.subr.mxu0 0.0
    %606 = vmatpush1.msra.mxu0 0.0
    %607 = vmatprep.subr.mxu0 0.0
    %608 = vmatpush1.msra.mxu0 0.0
    %609 = vmatprep.subr.mxu0 0.0
    %610 = vmatpush1.msra.mxu0 0.0
    %611 = vmatprep.subr.mxu0 0.0
    %612 = vmatpush1.msra.mxu0 0.0
    %613 = vmatprep.subr.mxu0 0.0
    %614 = vmatpush1.msra.mxu0 0.0
    %615 = vmatprep.subr.mxu0 0.0
    %616 = vmatpush1.msra.mxu0 0.0
    %617 = vmatprep.subr.mxu0 0.0
    %618 = vmatpush1.msra.mxu0 0.0
    %619 = vmatprep.subr.mxu0 0.0
    %620 = vmatpush1.msra.mxu0 0.0
    %621 = vmatprep.subr.mxu0 0.0
    %622 = vmatpush1.msra.mxu0 0.0
    %623 = vmatprep.subr.mxu0 0.0
    %624 = vmatpush1.msra.mxu0 0.0
    %625 = vmatprep.subr.mxu0 0.0
    %626 = vmatpush1.msra.mxu0 0.0
    %627 = vmatprep.mubr.f32.mxu0 0.0
    %628 = vmatmul.mubr.f32.gmra.mrb[0].mxu0 %v561
    %v629 = vpop.f32.mrb[0].mxu0
    %v630 = vadd.f32 0.0, %v629
    %v631 = vpop.f32.mrb[0].mxu0
    %632 = vdwg.mxu0
    %633 = vmatprep.subr.mxu0 0.0
    %634 = vmatpush1.msra.mxu0 %v79
    %635 = vmatprep.subr.mxu0 0.0
    %636 = vmatpush1.msra.mxu0 %v80
    %637 = vmatprep.subr.mxu0 0.0
    %638 = vmatpush1.msra.mxu0 %v81
    %639 = vmatprep.subr.mxu0 0.0
    %640 = vmatpush1.msra.mxu0 %v82
    %641 = vmatprep.subr.mxu0 0.0
    %642 = vmatpush1.msra.mxu0 0.0
    %643 = vmatprep.subr.mxu0 0.0
    %644 = vmatpush1.msra.mxu0 0.0
    %645 = vmatprep.subr.mxu0 0.0
    %646 = vmatpush1.msra.mxu0 0.0
    %647 = vmatprep.subr.mxu0 0.0
    %648 = vmatpush1.msra.mxu0 0.0
    %649 = vmatprep.subr.mxu0 0.0
    %650 = vmatpush1.msra.mxu0 0.0
    %651 = vmatprep.subr.mxu0 0.0
    %652 = vmatpush1.msra.mxu0 0.0
    %653 = vmatprep.subr.mxu0 0.0
    %654 = vmatpush1.msra.mxu0 0.0
    %655 = vmatprep.subr.mxu0 0.0
    %656 = vmatpush1.msra.mxu0 0.0
    %657 = vmatprep.subr.mxu0 0.0
    %658 = vmatpush1.msra.mxu0 0.0
    %659 = vmatprep.subr.mxu0 0.0
    %660 = vmatpush1.msra.mxu0 0.0
    %661 = vmatprep.subr.mxu0 0.0
    %662 = vmatpush1.msra.mxu0 0.0
    %663 = vmatprep.subr.mxu0 0.0
    %664 = vmatpush1.msra.mxu0 0.0
    %665 = vmatprep.subr.mxu0 0.0
    %666 = vmatpush1.msra.mxu0 0.0
    %667 = vmatprep.subr.mxu0 0.0
    %668 = vmatpush1.msra.mxu0 0.0
    %669 = vmatprep.subr.mxu0 0.0
    %670 = vmatpush1.msra.mxu0 0.0
    %671 = vmatprep.subr.mxu0 0.0
    %672 = vmatpush1.msra.mxu0 0.0
    %673 = vmatprep.subr.mxu0 0.0
    %674 = vmatpush1.msra.mxu0 0.0
    %675 = vmatprep.subr.mxu0 0.0
    %676 = vmatpush1.msra.mxu0 0.0
    %677 = vmatprep.subr.mxu0 0.0
    %678 = vmatpush1.msra.mxu0 0.0
    %679 = vmatprep.subr.mxu0 0.0
    %680 = vmatpush1.msra.mxu0 0.0
    %681 = vmatprep.subr.mxu0 0.0
    %682 = vmatpush1.msra.mxu0 0.0
    %683 = vmatprep.subr.mxu0 0.0
    %684 = vmatpush1.msra.mxu0 0.0
    %685 = vmatprep.subr.mxu0 0.0
    %686 = vmatpush1.msra.mxu0 0.0
    %687 = vmatprep.subr.mxu0 0.0
    %688 = vmatpush1.msra.mxu0 0.0
    %689 = vmatprep.subr.mxu0 0.0
    %690 = vmatpush1.msra.mxu0 0.0
    %691 = vmatprep.subr.mxu0 0.0
    %692 = vmatpush1.msra.mxu0 0.0
    %693 = vmatprep.subr.mxu0 0.0
    %694 = vmatpush1.msra.mxu0 0.0
    %695 = vmatprep.subr.mxu0 0.0
    %696 = vmatpush1.msra.mxu0 0.0
    %697 = vmatprep.mubr.f32.mxu0 0.0
    %698 = vmatmul.mubr.f32.gmra.mrb[0].mxu0 %v461
    %v699 = vpop.f32.mrb[0].mxu0
    %v700 = vadd.f32 %v630, %v699
    %v701 = vpop.f32.mrb[0].mxu0
    %702 = vdwg.mxu0
    %v703 = vadd.f32 %v700, %v431
    %v704 = vxor.u32 %v703, 2147483648
    %v705 = vmul.f32 %v704, 1.442695
    %v706 = vpow.pop %v705
    %v707 = vadd.f32 %v706, 1.0
    %v708 = vrcp.pop %v707
    %v709 = vmul.f32 1.0, %v708
    %v710 = vtanh.pop %v703
    %v711 = vmul.f32 %v709, %v451
    %713 = vrot.lane.b32.xlu0 %v710, 64
    %v714 = vpop.permute.xlu0 %713
    %v716 = vmul.f32 %v709, %v714
    %718 = vrot.lane.b32.xlu0 %v716, 32
    %v719 = vpop.permute.xlu0 %718
    %v721 = vadd.f32 %v711, %v719
    %v722 = vtanh.pop %v721
    %724 = vrot.lane.b32.xlu0 %v722, 64
    %v725 = vpop.permute.xlu0 %724
    %v727 = vmul.f32 %v709, %v725
    %729 = vrot.lane.b32.xlu0 %v557, 32
    %v730 = vpop.permute.xlu0 %729
    %v731 = vsel %vm88, %v730, 0
    %733 = vmatprep.subr.mxu0 0.0
    %734 = vmatpush1.msra.mxu0 %v75
    %735 = vmatprep.subr.mxu0 0.0
    %736 = vmatpush1.msra.mxu0 %v76
    %737 = vmatprep.subr.mxu0 0.0
    %738 = vmatpush1.msra.mxu0 %v77
    %739 = vmatprep.subr.mxu0 0.0
    %740 = vmatpush1.msra.mxu0 %v78
    %741 = vmatprep.subr.mxu0 0.0
    %742 = vmatpush1.msra.mxu0 0.0
    %743 = vmatprep.subr.mxu0 0.0
    %744 = vmatpush1.msra.mxu0 0.0
    %745 = vmatprep.subr.mxu0 0.0
    %746 = vmatpush1.msra.mxu0 0.0
    %747 = vmatprep.subr.mxu0 0.0
    %748 = vmatpush1.msra.mxu0 0.0
    %749 = vmatprep.subr.mxu0 0.0
    %750 = vmatpush1.msra.mxu0 0.0
    %751 = vmatprep.subr.mxu0 0.0
    %752 = vmatpush1.msra.mxu0 0.0
    %753 = vmatprep.subr.mxu0 0.0
    %754 = vmatpush1.msra.mxu0 0.0
    %755 = vmatprep.subr.mxu0 0.0
    %756 = vmatpush1.msra.mxu0 0.0
    %757 = vmatprep.subr.mxu0 0.0
    %758 = vmatpush1.msra.mxu0 0.0
    %759 = vmatprep.subr.mxu0 0.0
    %760 = vmatpush1.msra.mxu0 0.0
    %761 = vmatprep.subr.mxu0 0.0
    %762 = vmatpush1.msra.mxu0 0.0
    %763 = vmatprep.subr.mxu0 0.0
    %764 = vmatpush1.msra.mxu0 0.0
    %765 = vmatprep.subr.mxu0 0.0
    %766 = vmatpush1.msra.mxu0 0.0
    %767 = vmatprep.subr.mxu0 0.0
    %768 = vmatpush1.msra.mxu0 0.0
    %769 = vmatprep.subr.mxu0 0.0
    %770 = vmatpush1.msra.mxu0 0.0
    %771 = vmatprep.subr.mxu0 0.0
    %772 = vmatpush1.msra.mxu0 0.0
    %773 = vmatprep.subr.mxu0 0.0
    %774 = vmatpush1.msra.mxu0 0.0
    %775 = vmatprep.subr.mxu0 0.0
    %776 = vmatpush1.msra.mxu0 0.0
    %777 = vmatprep.subr.mxu0 0.0
    %778 = vmatpush1.msra.mxu0 0.0
    %779 = vmatprep.subr.mxu0 0.0
    %780 = vmatpush1.msra.mxu0 0.0
    %781 = vmatprep.subr.mxu0 0.0
    %782 = vmatpush1.msra.mxu0 0.0
    %783 = vmatprep.subr.mxu0 0.0
    %784 = vmatpush1.msra.mxu0 0.0
    %785 = vmatprep.subr.mxu0 0.0
    %786 = vmatpush1.msra.mxu0 0.0
    %787 = vmatprep.subr.mxu0 0.0
    %788 = vmatpush1.msra.mxu0 0.0
    %789 = vmatprep.subr.mxu0 0.0
    %790 = vmatpush1.msra.mxu0 0.0
    %791 = vmatprep.subr.mxu0 0.0
    %792 = vmatpush1.msra.mxu0 0.0
    %793 = vmatprep.subr.mxu0 0.0
    %794 = vmatpush1.msra.mxu0 0.0
    %795 = vmatprep.subr.mxu0 0.0
    %796 = vmatpush1.msra.mxu0 0.0
    %797 = vmatprep.mubr.f32.mxu0 0.0
    %798 = vmatmul.mubr.f32.gmra.mrb[0].mxu0 %v731
    %v799 = vpop.f32.mrb[0].mxu0
    %v800 = vadd.f32 0.0, %v799
    %v801 = vpop.f32.mrb[0].mxu0
    %802 = vdwg.mxu0
    %v803 = vadd.f32 %v70, %v800
    %v804 = vxor.u32 %v803, 2147483648
    %v805 = vmul.f32 %v804, 1.442695
    %v806 = vpow.pop %v805
    %v807 = vadd.f32 %v806, 1.0
    %v808 = vrcp.pop %v807
    %v809 = vmul.f32 1.0, %v808
    %v810 = vtanh.pop %v803
    %v811 = vmul.f32 %v809, %v551
    %813 = vrot.lane.b32.xlu0 %v810, 64
    %v814 = vpop.permute.xlu0 %813
    %v816 = vmul.f32 %v809, %v814
    %818 = vrot.lane.b32.xlu0 %v816, 32
    %v819 = vpop.permute.xlu0 %818
    %v821 = vadd.f32 %v811, %v819
    %v822 = vtanh.pop %v821
    %824 = vrot.lane.b32.xlu0 %v822, 64
    %v825 = vpop.permute.xlu0 %824
    %v827 = vmul.f32 %v809, %v825
    %829 = vrot.lane.b32.xlu0 %v727, 32
    %v830 = vpop.permute.xlu0 %829
    %v831 = vsel %vm88, %v830, 0
    %833 = vmatprep.subr.mxu0 0.0
    %834 = vmatpush1.msra.mxu0 %v83
    %835 = vmatprep.subr.mxu0 0.0
    %836 = vmatpush1.msra.mxu0 %v84
    %837 = vmatprep.subr.mxu0 0.0
    %838 = vmatpush1.msra.mxu0 %v85
    %839 = vmatprep.subr.mxu0 0.0
    %840 = vmatpush1.msra.mxu0 %v86
    %841 = vmatprep.subr.mxu0 0.0
    %842 = vmatpush1.msra.mxu0 0.0
    %843 = vmatprep.subr.mxu0 0.0
    %844 = vmatpush1.msra.mxu0 0.0
    %845 = vmatprep.subr.mxu0 0.0
    %846 = vmatpush1.msra.mxu0 0.0
    %847 = vmatprep.subr.mxu0 0.0
    %848 = vmatpush1.msra.mxu0 0.0
    %849 = vmatprep.subr.mxu0 0.0
    %850 = vmatpush1.msra.mxu0 0.0
    %851 = vmatprep.subr.mxu0 0.0
    %852 = vmatpush1.msra.mxu0 0.0
    %853 = vmatprep.subr.mxu0 0.0
    %854 = vmatpush1.msra.mxu0 0.0
    %855 = vmatprep.subr.mxu0 0.0
    %856 = vmatpush1.msra.mxu0 0.0
    %857 = vmatprep.subr.mxu0 0.0
    %858 = vmatpush1.msra.mxu0 0.0
    %859 = vmatprep.subr.mxu0 0.0
    %860 = vmatpush1.msra.mxu0 0.0
    %861 = vmatprep.subr.mxu0 0.0
    %862 = vmatpush1.msra.mxu0 0.0
    %863 = vmatprep.subr.mxu0 0.0
    %864 = vmatpush1.msra.mxu0 0.0
    %865 = vmatprep.subr.mxu0 0.0
    %866 = vmatpush1.msra.mxu0 0.0
    %867 = vmatprep.subr.mxu0 0.0
    %868 = vmatpush1.msra.mxu0 0.0
    %869 = vmatprep.subr.mxu0 0.0
    %870 = vmatpush1.msra.mxu0 0.0
    %871 = vmatprep.subr.mxu0 0.0
    %872 = vmatpush1.msra.mxu0 0.0
    %873 = vmatprep.subr.mxu0 0.0
    %874 = vmatpush1.msra.mxu0 0.0
    %875 = vmatprep.subr.mxu0 0.0
    %876 = vmatpush1.msra.mxu0 0.0
    %877 = vmatprep.subr.mxu0 0.0
    %878 = vmatpush1.msra.mxu0 0.0
    %879 = vmatprep.subr.mxu0 0.0
    %880 = vmatpush1.msra.mxu0 0.0
    %881 = vmatprep.subr.mxu0 0.0
    %882 = vmatpush1.msra.mxu0 0.0
    %883 = vmatprep.subr.mxu0 0.0
    %884 = vmatpush1.msra.mxu0 0.0
    %885 = vmatprep.subr.mxu0 0.0
    %886 = vmatpush1.msra.mxu0 0.0
    %887 = vmatprep.subr.mxu0 0.0
    %888 = vmatpush1.msra.mxu0 0.0
    %889 = vmatprep.subr.mxu0 0.0
    %890 = vmatpush1.msra.mxu0 0.0
    %891 = vmatprep.subr.mxu0 0.0
    %892 = vmatpush1.msra.mxu0 0.0
    %893 = vmatprep.subr.mxu0 0.0
    %894 = vmatpush1.msra.mxu0 0.0
    %895 = vmatprep.subr.mxu0 0.0
    %896 = vmatpush1.msra.mxu0 0.0
    %897 = vmatprep.mubr.f32.mxu0 0.0
    %898 = vmatmul.mubr.f32.gmra.mrb[0].mxu0 %v831
    %v899 = vpop.f32.mrb[0].mxu0
    %v900 = vadd.f32 0.0, %v899
    %v901 = vpop.f32.mrb[0].mxu0
    %902 = vdwg.mxu0
    %903 = vmatprep.subr.mxu0 0.0
    %904 = vmatpush1.msra.mxu0 %v79
    %905 = vmatprep.subr.mxu0 0.0
    %906 = vmatpush1.msra.mxu0 %v80
    %907 = vmatprep.subr.mxu0 0.0
    %908 = vmatpush1.msra.mxu0 %v81
    %909 = vmatprep.subr.mxu0 0.0
    %910 = vmatpush1.msra.mxu0 %v82
    %911 = vmatprep.subr.mxu0 0.0
    %912 = vmatpush1.msra.mxu0 0.0
    %913 = vmatprep.subr.mxu0 0.0
    %914 = vmatpush1.msra.mxu0 0.0
    %915 = vmatprep.subr.mxu0 0.0
    %916 = vmatpush1.msra.mxu0 0.0
    %917 = vmatprep.subr.mxu0 0.0
    %918 = vmatpush1.msra.mxu0 0.0
    %919 = vmatprep.subr.mxu0 0.0
    %920 = vmatpush1.msra.mxu0 0.0
    %921 = vmatprep.subr.mxu0 0.0
    %922 = vmatpush1.msra.mxu0 0.0
    %923 = vmatprep.subr.mxu0 0.0
    %924 = vmatpush1.msra.mxu0 0.0
    %925 = vmatprep.subr.mxu0 0.0
    %926 = vmatpush1.msra.mxu0 0.0
    %927 = vmatprep.subr.mxu0 0.0
    %928 = vmatpush1.msra.mxu0 0.0
    %929 = vmatprep.subr.mxu0 0.0
    %930 = vmatpush1.msra.mxu0 0.0
    %931 = vmatprep.subr.mxu0 0.0
    %932 = vmatpush1.msra.mxu0 0.0
    %933 = vmatprep.subr.mxu0 0.0
    %934 = vmatpush1.msra.mxu0 0.0
    %935 = vmatprep.subr.mxu0 0.0
    %936 = vmatpush1.msra.mxu0 0.0
    %937 = vmatprep.subr.mxu0 0.0
    %938 = vmatpush1.msra.mxu0 0.0
    %939 = vmatprep.subr.mxu0 0.0
    %940 = vmatpush1.msra.mxu0 0.0
    %941 = vmatprep.subr.mxu0 0.0
    %942 = vmatpush1.msra.mxu0 0.0
    %943 = vmatprep.subr.mxu0 0.0
    %944 = vmatpush1.msra.mxu0 0.0
    %945 = vmatprep.subr.mxu0 0.0
    %946 = vmatpush1.msra.mxu0 0.0
    %947 = vmatprep.subr.mxu0 0.0
    %948 = vmatpush1.msra.mxu0 0.0
    %949 = vmatprep.subr.mxu0 0.0
    %950 = vmatpush1.msra.mxu0 0.0
    %951 = vmatprep.subr.mxu0 0.0
    %952 = vmatpush1.msra.mxu0 0.0
    %953 = vmatprep.subr.mxu0 0.0
    %954 = vmatpush1.msra.mxu0 0.0
    %955 = vmatprep.subr.mxu0 0.0
    %956 = vmatpush1.msra.mxu0 0.0
    %957 = vmatprep.subr.mxu0 0.0
    %958 = vmatpush1.msra.mxu0 0.0
    %959 = vmatprep.subr.mxu0 0.0
    %960 = vmatpush1.msra.mxu0 0.0
    %961 = vmatprep.subr.mxu0 0.0
    %962 = vmatpush1.msra.mxu0 0.0
    %963 = vmatprep.subr.mxu0 0.0
    %964 = vmatpush1.msra.mxu0 0.0
    %965 = vmatprep.subr.mxu0 0.0
    %966 = vmatpush1.msra.mxu0 0.0
    %967 = vmatprep.mubr.f32.mxu0 0.0
    %968 = vmatmul.mubr.f32.gmra.mrb[0].mxu0 %v731
    %v969 = vpop.f32.mrb[0].mxu0
    %v970 = vadd.f32 %v900, %v969
    %v971 = vpop.f32.mrb[0].mxu0
    %972 = vdwg.mxu0
    %v973 = vadd.f32 %v970, %v431
    %v974 = vxor.u32 %v973, 2147483648
    %v975 = vmul.f32 %v974, 1.442695
    %v976 = vpow.pop %v975
    %v977 = vadd.f32 %v976, 1.0
    %v978 = vrcp.pop %v977
    %v979 = vmul.f32 1.0, %v978
    %v980 = vtanh.pop %v973
    %v981 = vmul.f32 %v979, %v721
    %983 = vrot.lane.b32.xlu0 %v980, 64
    %v984 = vpop.permute.xlu0 %983
    %v986 = vmul.f32 %v979, %v984
    %988 = vrot.lane.b32.xlu0 %v986, 32
    %v989 = vpop.permute.xlu0 %988
    %v991 = vadd.f32 %v981, %v989
    %v992 = vtanh.pop %v991
    %994 = vrot.lane.b32.xlu0 %v992, 64
    %v995 = vpop.permute.xlu0 %994
    %v997 = vmul.f32 %v979, %v995
    %999 = vrot.lane.b32.xlu0 %v827, 32
    %v1000 = vpop.permute.xlu0 %999
    %v1001 = vsel %vm88, %v1000, 0
    %1003 = vmatprep.subr.mxu0 0.0
    %1004 = vmatpush1.msra.mxu0 %v75
    %1005 = vmatprep.subr.mxu0 0.0
    %1006 = vmatpush1.msra.mxu0 %v76
    %1007 = vmatprep.subr.mxu0 0.0
    %1008 = vmatpush1.msra.mxu0 %v77
    %1009 = vmatprep.subr.mxu0 0.0
    %1010 = vmatpush1.msra.mxu0 %v78
    %1011 = vmatprep.subr.mxu0 0.0
    %1012 = vmatpush1.msra.mxu0 0.0
    %1013 = vmatprep.subr.mxu0 0.0
    %1014 = vmatpush1.msra.mxu0 0.0
    %1015 = vmatprep.subr.mxu0 0.0
    %1016 = vmatpush1.msra.mxu0 0.0
    %1017 = vmatprep.subr.mxu0 0.0
    %1018 = vmatpush1.msra.mxu0 0.0
    %1019 = vmatprep.subr.mxu0 0.0
    %1020 = vmatpush1.msra.mxu0 0.0
    %1021 = vmatprep.subr.mxu0 0.0
    %1022 = vmatpush1.msra.mxu0 0.0
    %1023 = vmatprep.subr.mxu0 0.0
    %1024 = vmatpush1.msra.mxu0 0.0
    %1025 = vmatprep.subr.mxu0 0.0
    %1026 = vmatpush1.msra.mxu0 0.0
    %1027 = vmatprep.subr.mxu0 0.0
    %1028 = vmatpush1.msra.mxu0 0.0
    %1029 = vmatprep.subr.mxu0 0.0
    %1030 = vmatpush1.msra.mxu0 0.0
    %1031 = vmatprep.subr.mxu0 0.0
    %1032 = vmatpush1.msra.mxu0 0.0
    %1033 = vmatprep.subr.mxu0 0.0
    %1034 = vmatpush1.msra.mxu0 0.0
    %1035 = vmatprep.subr.mxu0 0.0
    %1036 = vmatpush1.msra.mxu0 0.0
    %1037 = vmatprep.subr.mxu0 0.0
    %1038 = vmatpush1.msra.mxu0 0.0
    %1039 = vmatprep.subr.mxu0 0.0
    %1040 = vmatpush1.msra.mxu0 0.0
    %1041 = vmatprep.subr.mxu0 0.0
    %1042 = vmatpush1.msra.mxu0 0.0
    %1043 = vmatprep.subr.mxu0 0.0
    %1044 = vmatpush1.msra.mxu0 0.0
    %1045 = vmatprep.subr.mxu0 0.0
    %1046 = vmatpush1.msra.mxu0 0.0
    %1047 = vmatprep.subr.mxu0 0.0
    %1048 = vmatpush1.msra.mxu0 0.0
    %1049 = vmatprep.subr.mxu0 0.0
    %1050 = vmatpush1.msra.mxu0 0.0
    %1051 = vmatprep.subr.mxu0 0.0
    %1052 = vmatpush1.msra.mxu0 0.0
    %1053 = vmatprep.subr.mxu0 0.0
    %1054 = vmatpush1.msra.mxu0 0.0
    %1055 = vmatprep.subr.mxu0 0.0
    %1056 = vmatpush1.msra.mxu0 0.0
    %1057 = vmatprep.subr.mxu0 0.0
    %1058 = vmatpush1.msra.mxu0 0.0
    %1059 = vmatprep.subr.mxu0 0.0
    %1060 = vmatpush1.msra.mxu0 0.0
    %1061 = vmatprep.subr.mxu0 0.0
    %1062 = vmatpush1.msra.mxu0 0.0
    %1063 = vmatprep.subr.mxu0 0.0
    %1064 = vmatpush1.msra.mxu0 0.0
    %1065 = vmatprep.subr.mxu0 0.0
    %1066 = vmatpush1.msra.mxu0 0.0
    %1067 = vmatprep.mubr.f32.mxu0 0.0
    %1068 = vmatmul.mubr.f32.gmra.mrb[0].mxu0 %v1001
    %v1069 = vpop.f32.mrb[0].mxu0
    %v1070 = vadd.f32 0.0, %v1069
    %v1071 = vpop.f32.mrb[0].mxu0
    %1072 = vdwg.mxu0
    %v1073 = vadd.f32 %v71, %v1070
    %v1074 = vxor.u32 %v1073, 2147483648
    %v1075 = vmul.f32 %v1074, 1.442695
    %v1076 = vpow.pop %v1075
    %v1077 = vadd.f32 %v1076, 1.0
    %v1078 = vrcp.pop %v1077
    %v1079 = vmul.f32 1.0, %v1078
    %v1080 = vtanh.pop %v1073
    %v1081 = vmul.f32 %v1079, %v821
    %1083 = vrot.lane.b32.xlu0 %v1080, 64
    %v1084 = vpop.permute.xlu0 %1083
    %v1086 = vmul.f32 %v1079, %v1084
    %1088 = vrot.lane.b32.xlu0 %v1086, 32
    %v1089 = vpop.permute.xlu0 %1088
    %v1091 = vadd.f32 %v1081, %v1089
    %v1092 = vtanh.pop %v1091
    %1094 = vrot.lane.b32.xlu0 %v1092, 64
    %v1095 = vpop.permute.xlu0 %1094
    %v1097 = vmul.f32 %v1079, %v1095
    %1099 = vrot.lane.b32.xlu0 %v997, 32
    %v1100 = vpop.permute.xlu0 %1099
    %v1101 = vsel %vm88, %v1100, 0
    %1103 = vmatprep.subr.mxu0 0.0
    %1104 = vmatpush1.msra.mxu0 %v83
    %1105 = vmatprep.subr.mxu0 0.0
    %1106 = vmatpush1.msra.mxu0 %v84
    %1107 = vmatprep.subr.mxu0 0.0
    %1108 = vmatpush1.msra.mxu0 %v85
    %1109 = vmatprep.subr.mxu0 0.0
    %1110 = vmatpush1.msra.mxu0 %v86
    %1111 = vmatprep.subr.mxu0 0.0
    %1112 = vmatpush1.msra.mxu0 0.0
    %1113 = vmatprep.subr.mxu0 0.0
    %1114 = vmatpush1.msra.mxu0 0.0
    %1115 = vmatprep.subr.mxu0 0.0
    %1116 = vmatpush1.msra.mxu0 0.0
    %1117 = vmatprep.subr.mxu0 0.0
    %1118 = vmatpush1.msra.mxu0 0.0
    %1119 = vmatprep.subr.mxu0 0.0
    %1120 = vmatpush1.msra.mxu0 0.0
    %1121 = vmatprep.subr.mxu0 0.0
    %1122 = vmatpush1.msra.mxu0 0.0
    %1123 = vmatprep.subr.mxu0 0.0
    %1124 = vmatpush1.msra.mxu0 0.0
    %1125 = vmatprep.subr.mxu0 0.0
    %1126 = vmatpush1.msra.mxu0 0.0
    %1127 = vmatprep.subr.mxu0 0.0
    %1128 = vmatpush1.msra.mxu0 0.0
    %1129 = vmatprep.subr.mxu0 0.0
    %1130 = vmatpush1.msra.mxu0 0.0
    %1131 = vmatprep.subr.mxu0 0.0
    %1132 = vmatpush1.msra.mxu0 0.0
    %1133 = vmatprep.subr.mxu0 0.0
    %1134 = vmatpush1.msra.mxu0 0.0
    %1135 = vmatprep.subr.mxu0 0.0
    %1136 = vmatpush1.msra.mxu0 0.0
    %1137 = vmatprep.subr.mxu0 0.0
    %1138 = vmatpush1.msra.mxu0 0.0
    %1139 = vmatprep.subr.mxu0 0.0
    %1140 = vmatpush1.msra.mxu0 0.0
    %1141 = vmatprep.subr.mxu0 0.0
    %1142 = vmatpush1.msra.mxu0 0.0
    %1143 = vmatprep.subr.mxu0 0.0
    %1144 = vmatpush1.msra.mxu0 0.0
    %1145 = vmatprep.subr.mxu0 0.0
    %1146 = vmatpush1.msra.mxu0 0.0
    %1147 = vmatprep.subr.mxu0 0.0
    %1148 = vmatpush1.msra.mxu0 0.0
    %1149 = vmatprep.subr.mxu0 0.0
    %1150 = vmatpush1.msra.mxu0 0.0
    %1151 = vmatprep.subr.mxu0 0.0
    %1152 = vmatpush1.msra.mxu0 0.0
    %1153 = vmatprep.subr.mxu0 0.0
    %1154 = vmatpush1.msra.mxu0 0.0
    %1155 = vmatprep.subr.mxu0 0.0
    %1156 = vmatpush1.msra.mxu0 0.0
    %1157 = vmatprep.subr.mxu0 0.0
    %1158 = vmatpush1.msra.mxu0 0.0
    %1159 = vmatprep.subr.mxu0 0.0
    %1160 = vmatpush1.msra.mxu0 0.0
    %1161 = vmatprep.subr.mxu0 0.0
    %1162 = vmatpush1.msra.mxu0 0.0
    %1163 = vmatprep.subr.mxu0 0.0
    %1164 = vmatpush1.msra.mxu0 0.0
    %1165 = vmatprep.subr.mxu0 0.0
    %1166 = vmatpush1.msra.mxu0 0.0
    %1167 = vmatprep.mubr.f32.mxu0 0.0
    %1168 = vmatmul.mubr.f32.gmra.mrb[0].mxu0 %v1101
    %v1169 = vpop.f32.mrb[0].mxu0
    %v1170 = vadd.f32 0.0, %v1169
    %v1171 = vpop.f32.mrb[0].mxu0
    %1172 = vdwg.mxu0
    %1173 = vmatprep.subr.mxu0 0.0
    %1174 = vmatpush1.msra.mxu0 %v79
    %1175 = vmatprep.subr.mxu0 0.0
    %1176 = vmatpush1.msra.mxu0 %v80
    %1177 = vmatprep.subr.mxu0 0.0
    %1178 = vmatpush1.msra.mxu0 %v81
    %1179 = vmatprep.subr.mxu0 0.0
    %1180 = vmatpush1.msra.mxu0 %v82
    %1181 = vmatprep.subr.mxu0 0.0
    %1182 = vmatpush1.msra.mxu0 0.0
    %1183 = vmatprep.subr.mxu0 0.0
    %1184 = vmatpush1.msra.mxu0 0.0
    %1185 = vmatprep.subr.mxu0 0.0
    %1186 = vmatpush1.msra.mxu0 0.0
    %1187 = vmatprep.subr.mxu0 0.0
    %1188 = vmatpush1.msra.mxu0 0.0
    %1189 = vmatprep.subr.mxu0 0.0
    %1190 = vmatpush1.msra.mxu0 0.0
    %1191 = vmatprep.subr.mxu0 0.0
    %1192 = vmatpush1.msra.mxu0 0.0
    %1193 = vmatprep.subr.mxu0 0.0
    %1194 = vmatpush1.msra.mxu0 0.0
    %1195 = vmatprep.subr.mxu0 0.0
    %1196 = vmatpush1.msra.mxu0 0.0
    %1197 = vmatprep.subr.mxu0 0.0
    %1198 = vmatpush1.msra.mxu0 0.0
    %1199 = vmatprep.subr.mxu0 0.0
    %1200 = vmatpush1.msra.mxu0 0.0
    %1201 = vmatprep.subr.mxu0 0.0
    %1202 = vmatpush1.msra.mxu0 0.0
    %1203 = vmatprep.subr.mxu0 0.0
    %1204 = vmatpush1.msra.mxu0 0.0
    %1205 = vmatprep.subr.mxu0 0.0
    %1206 = vmatpush1.msra.mxu0 0.0
    %1207 = vmatprep.subr.mxu0 0.0
    %1208 = vmatpush1.msra.mxu0 0.0
    %1209 = vmatprep.subr.mxu0 0.0
    %1210 = vmatpush1.msra.mxu0 0.0
    %1211 = vmatprep.subr.mxu0 0.0
    %1212 = vmatpush1.msra.mxu0 0.0
    %1213 = vmatprep.subr.mxu0 0.0
    %1214 = vmatpush1.msra.mxu0 0.0
    %1215 = vmatprep.subr.mxu0 0.0
    %1216 = vmatpush1.msra.mxu0 0.0
    %1217 = vmatprep.subr.mxu0 0.0
    %1218 = vmatpush1.msra.mxu0 0.0
    %1219 = vmatprep.subr.mxu0 0.0
    %1220 = vmatpush1.msra.mxu0 0.0
    %1221 = vmatprep.subr.mxu0 0.0
    %1222 = vmatpush1.msra.mxu0 0.0
    %1223 = vmatprep.subr.mxu0 0.0
    %1224 = vmatpush1.msra.mxu0 0.0
    %1225 = vmatprep.subr.mxu0 0.0
    %1226 = vmatpush1.msra.mxu0 0.0
    %1227 = vmatprep.subr.mxu0 0.0
    %1228 = vmatpush1.msra.mxu0 0.0
    %1229 = vmatprep.subr.mxu0 0.0
    %1230 = vmatpush1.msra.mxu0 0.0
    %1231 = vmatprep.subr.mxu0 0.0
    %1232 = vmatpush1.msra.mxu0 0.0
    %1233 = vmatprep.subr.mxu0 0.0
    %1234 = vmatpush1.msra.mxu0 0.0
    %1235 = vmatprep.subr.mxu0 0.0
    %1236 = vmatpush1.msra.mxu0 0.0
    %1237 = vmatprep.mubr.f32.mxu0 0.0
    %1238 = vmatmul.mubr.f32.gmra.mrb[0].mxu0 %v1001
    %v1239 = vpop.f32.mrb[0].mxu0
    %v1240 = vadd.f32 %v1170, %v1239
    %v1241 = vpop.f32.mrb[0].mxu0
    %1242 = vdwg.mxu0
    %v1243 = vadd.f32 %v1240, %v431
    %v1244 = vxor.u32 %v1243, 2147483648
    %v1245 = vmul.f32 %v1244, 1.442695
    %v1246 = vpow.pop %v1245
    %v1247 = vadd.f32 %v1246, 1.0
    %v1248 = vrcp.pop %v1247
    %v1249 = vmul.f32 1.0, %v1248
    %v1250 = vtanh.pop %v1243
    %v1251 = vmul.f32 %v1249, %v991
    %1253 = vrot.lane.b32.xlu0 %v1250, 64
    %v1254 = vpop.permute.xlu0 %1253
    %v1256 = vmul.f32 %v1249, %v1254
    %1258 = vrot.lane.b32.xlu0 %v1256, 32
    %v1259 = vpop.permute.xlu0 %1258
    %v1261 = vadd.f32 %v1251, %v1259
    %v1262 = vtanh.pop %v1261
    %1264 = vrot.lane.b32.xlu0 %v1262, 64
    %v1265 = vpop.permute.xlu0 %1264
    %v1267 = vmul.f32 %v1249, %v1265
    %1269 = vrot.lane.b32.xlu0 %v1097, 32
    %v1270 = vpop.permute.xlu0 %1269
    %v1271 = vsel %vm88, %v1270, 0
    %1273 = vmatprep.subr.mxu0 0.0
    %1274 = vmatpush1.msra.mxu0 %v75
    %1275 = vmatprep.subr.mxu0 0.0
    %1276 = vmatpush1.msra.mxu0 %v76
    %1277 = vmatprep.subr.mxu0 0.0
    %1278 = vmatpush1.msra.mxu0 %v77
    %1279 = vmatprep.subr.mxu0 0.0
    %1280 = vmatpush1.msra.mxu0 %v78
    %1281 = vmatprep.subr.mxu0 0.0
    %1282 = vmatpush1.msra.mxu0 0.0
    %1283 = vmatprep.subr.mxu0 0.0
    %1284 = vmatpush1.msra.mxu0 0.0
    %1285 = vmatprep.subr.mxu0 0.0
    %1286 = vmatpush1.msra.mxu0 0.0
    %1287 = vmatprep.subr.mxu0 0.0
    %1288 = vmatpush1.msra.mxu0 0.0
    %1289 = vmatprep.subr.mxu0 0.0
    %1290 = vmatpush1.msra.mxu0 0.0
    %1291 = vmatprep.subr.mxu0 0.0
    %1292 = vmatpush1.msra.mxu0 0.0
    %1293 = vmatprep.subr.mxu0 0.0
    %1294 = vmatpush1.msra.mxu0 0.0
    %1295 = vmatprep.subr.mxu0 0.0
    %1296 = vmatpush1.msra.mxu0 0.0
    %1297 = vmatprep.subr.mxu0 0.0
    %1298 = vmatpush1.msra.mxu0 0.0
    %1299 = vmatprep.subr.mxu0 0.0
    %1300 = vmatpush1.msra.mxu0 0.0
    %1301 = vmatprep.subr.mxu0 0.0
    %1302 = vmatpush1.msra.mxu0 0.0
    %1303 = vmatprep.subr.mxu0 0.0
    %1304 = vmatpush1.msra.mxu0 0.0
    %1305 = vmatprep.subr.mxu0 0.0
    %1306 = vmatpush1.msra.mxu0 0.0
    %1307 = vmatprep.subr.mxu0 0.0
    %1308 = vmatpush1.msra.mxu0 0.0
    %1309 = vmatprep.subr.mxu0 0.0
    %1310 = vmatpush1.msra.mxu0 0.0
    %1311 = vmatprep.subr.mxu0 0.0
    %1312 = vmatpush1.msra.mxu0 0.0
    %1313 = vmatprep.subr.mxu0 0.0
    %1314 = vmatpush1.msra.mxu0 0.0
    %1315 = vmatprep.subr.mxu0 0.0
    %1316 = vmatpush1.msra.mxu0 0.0
    %1317 = vmatprep.subr.mxu0 0.0
    %1318 = vmatpush1.msra.mxu0 0.0
    %1319 = vmatprep.subr.mxu0 0.0
    %1320 = vmatpush1.msra.mxu0 0.0
    %1321 = vmatprep.subr.mxu0 0.0
    %1322 = vmatpush1.msra.mxu0 0.0
    %1323 = vmatprep.subr.mxu0 0.0
    %1324 = vmatpush1.msra.mxu0 0.0
    %1325 = vmatprep.subr.mxu0 0.0
    %1326 = vmatpush1.msra.mxu0 0.0
    %1327 = vmatprep.subr.mxu0 0.0
    %1328 = vmatpush1.msra.mxu0 0.0
    %1329 = vmatprep.subr.mxu0 0.0
    %1330 = vmatpush1.msra.mxu0 0.0
    %1331 = vmatprep.subr.mxu0 0.0
    %1332 = vmatpush1.msra.mxu0 0.0
    %1333 = vmatprep.subr.mxu0 0.0
    %1334 = vmatpush1.msra.mxu0 0.0
    %1335 = vmatprep.subr.mxu0 0.0
    %1336 = vmatpush1.msra.mxu0 0.0
    %1337 = vmatprep.mubr.f32.mxu0 0.0
    %1338 = vmatmul.mubr.f32.gmra.mrb[0].mxu0 %v1271
    %v1339 = vpop.f32.mrb[0].mxu0
    %v1340 = vadd.f32 0.0, %v1339
    %v1341 = vpop.f32.mrb[0].mxu0
    %1342 = vdwg.mxu0
    %v1343 = vadd.f32 %v72, %v1340
    %v1344 = vxor.u32 %v1343, 2147483648
    %v1345 = vmul.f32 %v1344, 1.442695
    %v1346 = vpow.pop %v1345
    %v1347 = vadd.f32 %v1346, 1.0
    %v1348 = vrcp.pop %v1347
    %v1349 = vmul.f32 1.0, %v1348
    %v1350 = vtanh.pop %v1343
    %v1351 = vmul.f32 %v1349, %v1091
    %1353 = vrot.lane.b32.xlu0 %v1350, 64
    %v1354 = vpop.permute.xlu0 %1353
    %v1356 = vmul.f32 %v1349, %v1354
    %1358 = vrot.lane.b32.xlu0 %v1356, 32
    %v1359 = vpop.permute.xlu0 %1358
    %v1361 = vadd.f32 %v1351, %v1359
    %v1362 = vtanh.pop %v1361
    %1364 = vrot.lane.b32.xlu0 %v1362, 64
    %v1365 = vpop.permute.xlu0 %1364
    %v1367 = vmul.f32 %v1349, %v1365
    %1369 = vrot.lane.b32.xlu0 %v1267, 32
    %v1370 = vpop.permute.xlu0 %1369
    %v1371 = vsel %vm88, %v1370, 0
    %1373 = vmatprep.subr.mxu0 0.0
    %1374 = vmatpush1.msra.mxu0 %v83
    %1375 = vmatprep.subr.mxu0 0.0
    %1376 = vmatpush1.msra.mxu0 %v84
    %1377 = vmatprep.subr.mxu0 0.0
    %1378 = vmatpush1.msra.mxu0 %v85
    %1379 = vmatprep.subr.mxu0 0.0
    %1380 = vmatpush1.msra.mxu0 %v86
    %1381 = vmatprep.subr.mxu0 0.0
    %1382 = vmatpush1.msra.mxu0 0.0
    %1383 = vmatprep.subr.mxu0 0.0
    %1384 = vmatpush1.msra.mxu0 0.0
    %1385 = vmatprep.subr.mxu0 0.0
    %1386 = vmatpush1.msra.mxu0 0.0
    %1387 = vmatprep.subr.mxu0 0.0
    %1388 = vmatpush1.msra.mxu0 0.0
    %1389 = vmatprep.subr.mxu0 0.0
    %1390 = vmatpush1.msra.mxu0 0.0
    %1391 = vmatprep.subr.mxu0 0.0
    %1392 = vmatpush1.msra.mxu0 0.0
    %1393 = vmatprep.subr.mxu0 0.0
    %1394 = vmatpush1.msra.mxu0 0.0
    %1395 = vmatprep.subr.mxu0 0.0
    %1396 = vmatpush1.msra.mxu0 0.0
    %1397 = vmatprep.subr.mxu0 0.0
    %1398 = vmatpush1.msra.mxu0 0.0
    %1399 = vmatprep.subr.mxu0 0.0
    %1400 = vmatpush1.msra.mxu0 0.0
    %1401 = vmatprep.subr.mxu0 0.0
    %1402 = vmatpush1.msra.mxu0 0.0
    %1403 = vmatprep.subr.mxu0 0.0
    %1404 = vmatpush1.msra.mxu0 0.0
    %1405 = vmatprep.subr.mxu0 0.0
    %1406 = vmatpush1.msra.mxu0 0.0
    %1407 = vmatprep.subr.mxu0 0.0
    %1408 = vmatpush1.msra.mxu0 0.0
    %1409 = vmatprep.subr.mxu0 0.0
    %1410 = vmatpush1.msra.mxu0 0.0
    %1411 = vmatprep.subr.mxu0 0.0
    %1412 = vmatpush1.msra.mxu0 0.0
    %1413 = vmatprep.subr.mxu0 0.0
    %1414 = vmatpush1.msra.mxu0 0.0
    %1415 = vmatprep.subr.mxu0 0.0
    %1416 = vmatpush1.msra.mxu0 0.0
    %1417 = vmatprep.subr.mxu0 0.0
    %1418 = vmatpush1.msra.mxu0 0.0
    %1419 = vmatprep.subr.mxu0 0.0
    %1420 = vmatpush1.msra.mxu0 0.0
    %1421 = vmatprep.subr.mxu0 0.0
    %1422 = vmatpush1.msra.mxu0 0.0
    %1423 = vmatprep.subr.mxu0 0.0
    %1424 = vmatpush1.msra.mxu0 0.0
    %1425 = vmatprep.subr.mxu0 0.0
    %1426 = vmatpush1.msra.mxu0 0.0
    %1427 = vmatprep.subr.mxu0 0.0
    %1428 = vmatpush1.msra.mxu0 0.0
    %1429 = vmatprep.subr.mxu0 0.0
    %1430 = vmatpush1.msra.mxu0 0.0
    %1431 = vmatprep.subr.mxu0 0.0
    %1432 = vmatpush1.msra.mxu0 0.0
    %1433 = vmatprep.subr.mxu0 0.0
    %1434 = vmatpush1.msra.mxu0 0.0
    %1435 = vmatprep.subr.mxu0 0.0
    %1436 = vmatpush1.msra.mxu0 0.0
    %1437 = vmatprep.mubr.f32.mxu0 0.0
    %1438 = vmatmul.mubr.f32.gmra.mrb[0].mxu0 %v1371
    %v1439 = vpop.f32.mrb[0].mxu0
    %v1440 = vadd.f32 0.0, %v1439
    %v1441 = vpop.f32.mrb[0].mxu0
    %1442 = vdwg.mxu0
    %1443 = vmatprep.subr.mxu0 0.0
    %1444 = vmatpush1.msra.mxu0 %v79
    %1445 = vmatprep.subr.mxu0 0.0
    %1446 = vmatpush1.msra.mxu0 %v80
    %1447 = vmatprep.subr.mxu0 0.0
    %1448 = vmatpush1.msra.mxu0 %v81
    %1449 = vmatprep.subr.mxu0 0.0
    %1450 = vmatpush1.msra.mxu0 %v82
    %1451 = vmatprep.subr.mxu0 0.0
    %1452 = vmatpush1.msra.mxu0 0.0
    %1453 = vmatprep.subr.mxu0 0.0
    %1454 = vmatpush1.msra.mxu0 0.0
    %1455 = vmatprep.subr.mxu0 0.0
    %1456 = vmatpush1.msra.mxu0 0.0
    %1457 = vmatprep.subr.mxu0 0.0
    %1458 = vmatpush1.msra.mxu0 0.0
    %1459 = vmatprep.subr.mxu0 0.0
    %1460 = vmatpush1.msra.mxu0 0.0
    %1461 = vmatprep.subr.mxu0 0.0
    %1462 = vmatpush1.msra.mxu0 0.0
    %1463 = vmatprep.subr.mxu0 0.0
    %1464 = vmatpush1.msra.mxu0 0.0
    %1465 = vmatprep.subr.mxu0 0.0
    %1466 = vmatpush1.msra.mxu0 0.0
    %1467 = vmatprep.subr.mxu0 0.0
    %1468 = vmatpush1.msra.mxu0 0.0
    %1469 = vmatprep.subr.mxu0 0.0
    %1470 = vmatpush1.msra.mxu0 0.0
    %1471 = vmatprep.subr.mxu0 0.0
    %1472 = vmatpush1.msra.mxu0 0.0
    %1473 = vmatprep.subr.mxu0 0.0
    %1474 = vmatpush1.msra.mxu0 0.0
    %1475 = vmatprep.subr.mxu0 0.0
    %1476 = vmatpush1.msra.mxu0 0.0
    %1477 = vmatprep.subr.mxu0 0.0
    %1478 = vmatpush1.msra.mxu0 0.0
    %1479 = vmatprep.subr.mxu0 0.0
    %1480 = vmatpush1.msra.mxu0 0.0
    %1481 = vmatprep.subr.mxu0 0.0
    %1482 = vmatpush1.msra.mxu0 0.0
    %1483 = vmatprep.subr.mxu0 0.0
    %1484 = vmatpush1.msra.mxu0 0.0
    %1485 = vmatprep.subr.mxu0 0.0
    %1486 = vmatpush1.msra.mxu0 0.0
    %1487 = vmatprep.subr.mxu0 0.0
    %1488 = vmatpush1.msra.mxu0 0.0
    %1489 = vmatprep.subr.mxu0 0.0
    %1490 = vmatpush1.msra.mxu0 0.0
    %1491 = vmatprep.subr.mxu0 0.0
    %1492 = vmatpush1.msra.mxu0 0.0
    %1493 = vmatprep.subr.mxu0 0.0
    %1494 = vmatpush1.msra.mxu0 0.0
    %1495 = vmatprep.subr.mxu0 0.0
    %1496 = vmatpush1.msra.mxu0 0.0
    %1497 = vmatprep.subr.mxu0 0.0
    %1498 = vmatpush1.msra.mxu0 0.0
    %1499 = vmatprep.subr.mxu0 0.0
    %1500 = vmatpush1.msra.mxu0 0.0
    %1501 = vmatprep.subr.mxu0 0.0
    %1502 = vmatpush1.msra.mxu0 0.0
    %1503 = vmatprep.subr.mxu0 0.0
    %1504 = vmatpush1.msra.mxu0 0.0
    %1505 = vmatprep.subr.mxu0 0.0
    %1506 = vmatpush1.msra.mxu0 0.0
    %1507 = vmatprep.mubr.f32.mxu0 0.0
    %1508 = vmatmul.mubr.f32.gmra.mrb[0].mxu0 %v1271
    %v1509 = vpop.f32.mrb[0].mxu0
    %v1510 = vadd.f32 %v1440, %v1509
    %v1511 = vpop.f32.mrb[0].mxu0
    %1512 = vdwg.mxu0
    %v1513 = vadd.f32 %v1510, %v431
    %v1514 = vxor.u32 %v1513, 2147483648
    %v1515 = vmul.f32 %v1514, 1.442695
    %v1516 = vpow.pop %v1515
    %v1517 = vadd.f32 %v1516, 1.0
    %v1518 = vrcp.pop %v1517
    %v1519 = vmul.f32 1.0, %v1518
    %v1520 = vtanh.pop %v1513
    %v1521 = vmul.f32 %v1519, %v1261
    %1523 = vrot.lane.b32.xlu0 %v1520, 64
    %v1524 = vpop.permute.xlu0 %1523
    %v1526 = vmul.f32 %v1519, %v1524
    %1528 = vrot.lane.b32.xlu0 %v1526, 32
    %v1529 = vpop.permute.xlu0 %1528
    %v1531 = vadd.f32 %v1521, %v1529
    %v1532 = vtanh.pop %v1531
    %1534 = vrot.lane.b32.xlu0 %v1532, 64
    %v1535 = vpop.permute.xlu0 %1534
    %v1537 = vmul.f32 %v1519, %v1535
    %1539 = vrot.lane.b32.xlu0 %v1367, 32
    %v1540 = vpop.permute.xlu0 %1539
    %v1541 = vsel %vm88, %v1540, 0
    %1543 = vmatprep.subr.mxu0 0.0
    %1544 = vmatpush1.msra.mxu0 %v75
    %1545 = vmatprep.subr.mxu0 0.0
    %1546 = vmatpush1.msra.mxu0 %v76
    %1547 = vmatprep.subr.mxu0 0.0
    %1548 = vmatpush1.msra.mxu0 %v77
    %1549 = vmatprep.subr.mxu0 0.0
    %1550 = vmatpush1.msra.mxu0 %v78
    %1551 = vmatprep.subr.mxu0 0.0
    %1552 = vmatpush1.msra.mxu0 0.0
    %1553 = vmatprep.subr.mxu0 0.0
    %1554 = vmatpush1.msra.mxu0 0.0
    %1555 = vmatprep.subr.mxu0 0.0
    %1556 = vmatpush1.msra.mxu0 0.0
    %1557 = vmatprep.subr.mxu0 0.0
    %1558 = vmatpush1.msra.mxu0 0.0
    %1559 = vmatprep.subr.mxu0 0.0
    %1560 = vmatpush1.msra.mxu0 0.0
    %1561 = vmatprep.subr.mxu0 0.0
    %1562 = vmatpush1.msra.mxu0 0.0
    %1563 = vmatprep.subr.mxu0 0.0
    %1564 = vmatpush1.msra.mxu0 0.0
    %1565 = vmatprep.subr.mxu0 0.0
    %1566 = vmatpush1.msra.mxu0 0.0
    %1567 = vmatprep.subr.mxu0 0.0
    %1568 = vmatpush1.msra.mxu0 0.0
    %1569 = vmatprep.subr.mxu0 0.0
    %1570 = vmatpush1.msra.mxu0 0.0
    %1571 = vmatprep.subr.mxu0 0.0
    %1572 = vmatpush1.msra.mxu0 0.0
    %1573 = vmatprep.subr.mxu0 0.0
    %1574 = vmatpush1.msra.mxu0 0.0
    %1575 = vmatprep.subr.mxu0 0.0
    %1576 = vmatpush1.msra.mxu0 0.0
    %1577 = vmatprep.subr.mxu0 0.0
    %1578 = vmatpush1.msra.mxu0 0.0
    %1579 = vmatprep.subr.mxu0 0.0
    %1580 = vmatpush1.msra.mxu0 0.0
    %1581 = vmatprep.subr.mxu0 0.0
    %1582 = vmatpush1.msra.mxu0 0.0
    %1583 = vmatprep.subr.mxu0 0.0
    %1584 = vmatpush1.msra.mxu0 0.0
    %1585 = vmatprep.subr.mxu0 0.0
    %1586 = vmatpush1.msra.mxu0 0.0
    %1587 = vmatprep.subr.mxu0 0.0
    %1588 = vmatpush1.msra.mxu0 0.0
    %1589 = vmatprep.subr.mxu0 0.0
    %1590 = vmatpush1.msra.mxu0 0.0
    %1591 = vmatprep.subr.mxu0 0.0
    %1592 = vmatpush1.msra.mxu0 0.0
    %1593 = vmatprep.subr.mxu0 0.0
    %1594 = vmatpush1.msra.mxu0 0.0
    %1595 = vmatprep.subr.mxu0 0.0
    %1596 = vmatpush1.msra.mxu0 0.0
    %1597 = vmatprep.subr.mxu0 0.0
    %1598 = vmatpush1.msra.mxu0 0.0
    %1599 = vmatprep.subr.mxu0 0.0
    %1600 = vmatpush1.msra.mxu0 0.0
    %1601 = vmatprep.subr.mxu0 0.0
    %1602 = vmatpush1.msra.mxu0 0.0
    %1603 = vmatprep.subr.mxu0 0.0
    %1604 = vmatpush1.msra.mxu0 0.0
    %1605 = vmatprep.subr.mxu0 0.0
    %1606 = vmatpush1.msra.mxu0 0.0
    %1607 = vmatprep.mubr.f32.mxu0 0.0
    %1608 = vmatmul.mubr.f32.gmra.mrb[0].mxu0 %v1541
    %v1609 = vpop.f32.mrb[0].mxu0
    %v1610 = vadd.f32 0.0, %v1609
    %v1611 = vpop.f32.mrb[0].mxu0
    %1612 = vdwg.mxu0
    %v1613 = vadd.f32 %v73, %v1610
    %v1614 = vxor.u32 %v1613, 2147483648
    %v1615 = vmul.f32 %v1614, 1.442695
    %v1616 = vpow.pop %v1615
    %v1617 = vadd.f32 %v1616, 1.0
    %v1618 = vrcp.pop %v1617
    %v1619 = vmul.f32 1.0, %v1618
    %v1620 = vtanh.pop %v1613
    %v1621 = vmul.f32 %v1619, %v1361
    %1623 = vrot.lane.b32.xlu0 %v1620, 64
    %v1624 = vpop.permute.xlu0 %1623
    %v1626 = vmul.f32 %v1619, %v1624
    %1628 = vrot.lane.b32.xlu0 %v1626, 32
    %v1629 = vpop.permute.xlu0 %1628
    %v1631 = vadd.f32 %v1621, %v1629
    %v1632 = vtanh.pop %v1631
    %1634 = vrot.lane.b32.xlu0 %v1632, 64
    %v1635 = vpop.permute.xlu0 %1634
    %v1637 = vmul.f32 %v1619, %v1635
    %1639 = vrot.lane.b32.xlu0 %v1537, 32
    %v1640 = vpop.permute.xlu0 %1639
    %v1641 = vsel %vm88, %v1640, 0
    %1643 = vmatprep.subr.mxu0 0.0
    %1644 = vmatpush1.msra.mxu0 %v83
    %1645 = vmatprep.subr.mxu0 0.0
    %1646 = vmatpush1.msra.mxu0 %v84
    %1647 = vmatprep.subr.mxu0 0.0
    %1648 = vmatpush1.msra.mxu0 %v85
    %1649 = vmatprep.subr.mxu0 0.0
    %1650 = vmatpush1.msra.mxu0 %v86
    %1651 = vmatprep.subr.mxu0 0.0
    %1652 = vmatpush1.msra.mxu0 0.0
    %1653 = vmatprep.subr.mxu0 0.0
    %1654 = vmatpush1.msra.mxu0 0.0
    %1655 = vmatprep.subr.mxu0 0.0
    %1656 = vmatpush1.msra.mxu0 0.0
    %1657 = vmatprep.subr.mxu0 0.0
    %1658 = vmatpush1.msra.mxu0 0.0
    %1659 = vmatprep.subr.mxu0 0.0
    %1660 = vmatpush1.msra.mxu0 0.0
    %1661 = vmatprep.subr.mxu0 0.0
    %1662 = vmatpush1.msra.mxu0 0.0
    %1663 = vmatprep.subr.mxu0 0.0
    %1664 = vmatpush1.msra.mxu0 0.0
    %1665 = vmatprep.subr.mxu0 0.0
    %1666 = vmatpush1.msra.mxu0 0.0
    %1667 = vmatprep.subr.mxu0 0.0
    %1668 = vmatpush1.msra.mxu0 0.0
    %1669 = vmatprep.subr.mxu0 0.0
    %1670 = vmatpush1.msra.mxu0 0.0
    %1671 = vmatprep.subr.mxu0 0.0
    %1672 = vmatpush1.msra.mxu0 0.0
    %1673 = vmatprep.subr.mxu0 0.0
    %1674 = vmatpush1.msra.mxu0 0.0
    %1675 = vmatprep.subr.mxu0 0.0
    %1676 = vmatpush1.msra.mxu0 0.0
    %1677 = vmatprep.subr.mxu0 0.0
    %1678 = vmatpush1.msra.mxu0 0.0
    %1679 = vmatprep.subr.mxu0 0.0
    %1680 = vmatpush1.msra.mxu0 0.0
    %1681 = vmatprep.subr.mxu0 0.0
    %1682 = vmatpush1.msra.mxu0 0.0
    %1683 = vmatprep.subr.mxu0 0.0
    %1684 = vmatpush1.msra.mxu0 0.0
    %1685 = vmatprep.subr.mxu0 0.0
    %1686 = vmatpush1.msra.mxu0 0.0
    %1687 = vmatprep.subr.mxu0 0.0
    %1688 = vmatpush1.msra.mxu0 0.0
    %1689 = vmatprep.subr.mxu0 0.0
    %1690 = vmatpush1.msra.mxu0 0.0
    %1691 = vmatprep.subr.mxu0 0.0
    %1692 = vmatpush1.msra.mxu0 0.0
    %1693 = vmatprep.subr.mxu0 0.0
    %1694 = vmatpush1.msra.mxu0 0.0
    %1695 = vmatprep.subr.mxu0 0.0
    %1696 = vmatpush1.msra.mxu0 0.0
    %1697 = vmatprep.subr.mxu0 0.0
    %1698 = vmatpush1.msra.mxu0 0.0
    %1699 = vmatprep.subr.mxu0 0.0
    %1700 = vmatpush1.msra.mxu0 0.0
    %1701 = vmatprep.subr.mxu0 0.0
    %1702 = vmatpush1.msra.mxu0 0.0
    %1703 = vmatprep.subr.mxu0 0.0
    %1704 = vmatpush1.msra.mxu0 0.0
    %1705 = vmatprep.subr.mxu0 0.0
    %1706 = vmatpush1.msra.mxu0 0.0
    %1707 = vmatprep.mubr.f32.mxu0 0.0
    %1708 = vmatmul.mubr.f32.gmra.mrb[0].mxu0 %v1641
    %v1709 = vpop.f32.mrb[0].mxu0
    %v1710 = vadd.f32 0.0, %v1709
    %v1711 = vpop.f32.mrb[0].mxu0
    %1712 = vdwg.mxu0
    %1713 = vmatprep.subr.mxu0 0.0
    %1714 = vmatpush1.msra.mxu0 %v79
    %1715 = vmatprep.subr.mxu0 0.0
    %1716 = vmatpush1.msra.mxu0 %v80
    %1717 = vmatprep.subr.mxu0 0.0
    %1718 = vmatpush1.msra.mxu0 %v81
    %1719 = vmatprep.subr.mxu0 0.0
    %1720 = vmatpush1.msra.mxu0 %v82
    %1721 = vmatprep.subr.mxu0 0.0
    %1722 = vmatpush1.msra.mxu0 0.0
    %1723 = vmatprep.subr.mxu0 0.0
    %1724 = vmatpush1.msra.mxu0 0.0
    %1725 = vmatprep.subr.mxu0 0.0
    %1726 = vmatpush1.msra.mxu0 0.0
    %1727 = vmatprep.subr.mxu0 0.0
    %1728 = vmatpush1.msra.mxu0 0.0
    %1729 = vmatprep.subr.mxu0 0.0
    %1730 = vmatpush1.msra.mxu0 0.0
    %1731 = vmatprep.subr.mxu0 0.0
    %1732 = vmatpush1.msra.mxu0 0.0
    %1733 = vmatprep.subr.mxu0 0.0
    %1734 = vmatpush1.msra.mxu0 0.0
    %1735 = vmatprep.subr.mxu0 0.0
    %1736 = vmatpush1.msra.mxu0 0.0
    %1737 = vmatprep.subr.mxu0 0.0
    %1738 = vmatpush1.msra.mxu0 0.0
    %1739 = vmatprep.subr.mxu0 0.0
    %1740 = vmatpush1.msra.mxu0 0.0
    %1741 = vmatprep.subr.mxu0 0.0
    %1742 = vmatpush1.msra.mxu0 0.0
    %1743 = vmatprep.subr.mxu0 0.0
    %1744 = vmatpush1.msra.mxu0 0.0
    %1745 = vmatprep.subr.mxu0 0.0
    %1746 = vmatpush1.msra.mxu0 0.0
    %1747 = vmatprep.subr.mxu0 0.0
    %1748 = vmatpush1.msra.mxu0 0.0
    %1749 = vmatprep.subr.mxu0 0.0
    %1750 = vmatpush1.msra.mxu0 0.0
    %1751 = vmatprep.subr.mxu0 0.0
    %1752 = vmatpush1.msra.mxu0 0.0
    %1753 = vmatprep.subr.mxu0 0.0
    %1754 = vmatpush1.msra.mxu0 0.0
    %1755 = vmatprep.subr.mxu0 0.0
    %1756 = vmatpush1.msra.mxu0 0.0
    %1757 = vmatprep.subr.mxu0 0.0
    %1758 = vmatpush1.msra.mxu0 0.0
    %1759 = vmatprep.subr.mxu0 0.0
    %1760 = vmatpush1.msra.mxu0 0.0
    %1761 = vmatprep.subr.mxu0 0.0
    %1762 = vmatpush1.msra.mxu0 0.0
    %1763 = vmatprep.subr.mxu0 0.0
    %1764 = vmatpush1.msra.mxu0 0.0
    %1765 = vmatprep.subr.mxu0 0.0
    %1766 = vmatpush1.msra.mxu0 0.0
    %1767 = vmatprep.subr.mxu0 0.0
    %1768 = vmatpush1.msra.mxu0 0.0
    %1769 = vmatprep.subr.mxu0 0.0
    %1770 = vmatpush1.msra.mxu0 0.0
    %1771 = vmatprep.subr.mxu0 0.0
    %1772 = vmatpush1.msra.mxu0 0.0
    %1773 = vmatprep.subr.mxu0 0.0
    %1774 = vmatpush1.msra.mxu0 0.0
    %1775 = vmatprep.subr.mxu0 0.0
    %1776 = vmatpush1.msra.mxu0 0.0
    %1777 = vmatprep.mubr.f32.mxu0 0.0
    %1778 = vmatmul.mubr.f32.gmra.mrb[0].mxu0 %v1541
    %v1779 = vpop.f32.mrb[0].mxu0
    %v1780 = vadd.f32 %v1710, %v1779
    %v1781 = vpop.f32.mrb[0].mxu0
    %1782 = vdwg.mxu0
    %v1783 = vadd.f32 %v1780, %v431
    %v1784 = vxor.u32 %v1783, 2147483648
    %v1785 = vmul.f32 %v1784, 1.442695
    %v1786 = vpow.pop %v1785
    %v1787 = vadd.f32 %v1786, 1.0
    %v1788 = vrcp.pop %v1787
    %v1789 = vmul.f32 1.0, %v1788
    %v1790 = vtanh.pop %v1783
    %v1791 = vmul.f32 %v1789, %v1531
    %1793 = vrot.lane.b32.xlu0 %v1790, 64
    %v1794 = vpop.permute.xlu0 %1793
    %v1796 = vmul.f32 %v1789, %v1794
    %1798 = vrot.lane.b32.xlu0 %v1796, 32
    %v1799 = vpop.permute.xlu0 %1798
    %v1801 = vadd.f32 %v1791, %v1799
    %v1802 = vtanh.pop %v1801
    %1804 = vrot.lane.b32.xlu0 %v1802, 64
    %v1805 = vpop.permute.xlu0 %1804
    %v1807 = vmul.f32 %v1789, %v1805
    %1809 = vrot.lane.b32.xlu0 %v1637, 32
    %v1810 = vpop.permute.xlu0 %1809
    %v1811 = vsel %vm88, %v1810, 0
    %1813 = vmatprep.subr.mxu0 0.0
    %1814 = vmatpush1.msra.mxu0 %v75
    %1815 = vmatprep.subr.mxu0 0.0
    %1816 = vmatpush1.msra.mxu0 %v76
    %1817 = vmatprep.subr.mxu0 0.0
    %1818 = vmatpush1.msra.mxu0 %v77
    %1819 = vmatprep.subr.mxu0 0.0
    %1820 = vmatpush1.msra.mxu0 %v78
    %1821 = vmatprep.subr.mxu0 0.0
    %1822 = vmatpush1.msra.mxu0 0.0
    %1823 = vmatprep.subr.mxu0 0.0
    %1824 = vmatpush1.msra.mxu0 0.0
    %1825 = vmatprep.subr.mxu0 0.0
    %1826 = vmatpush1.msra.mxu0 0.0
    %1827 = vmatprep.subr.mxu0 0.0
    %1828 = vmatpush1.msra.mxu0 0.0
    %1829 = vmatprep.subr.mxu0 0.0
    %1830 = vmatpush1.msra.mxu0 0.0
    %1831 = vmatprep.subr.mxu0 0.0
    %1832 = vmatpush1.msra.mxu0 0.0
    %1833 = vmatprep.subr.mxu0 0.0
    %1834 = vmatpush1.msra.mxu0 0.0
    %1835 = vmatprep.subr.mxu0 0.0
    %1836 = vmatpush1.msra.mxu0 0.0
    %1837 = vmatprep.subr.mxu0 0.0
    %1838 = vmatpush1.msra.mxu0 0.0
    %1839 = vmatprep.subr.mxu0 0.0
    %1840 = vmatpush1.msra.mxu0 0.0
    %1841 = vmatprep.subr.mxu0 0.0
    %1842 = vmatpush1.msra.mxu0 0.0
    %1843 = vmatprep.subr.mxu0 0.0
    %1844 = vmatpush1.msra.mxu0 0.0
    %1845 = vmatprep.subr.mxu0 0.0
    %1846 = vmatpush1.msra.mxu0 0.0
    %1847 = vmatprep.subr.mxu0 0.0
    %1848 = vmatpush1.msra.mxu0 0.0
    %1849 = vmatprep.subr.mxu0 0.0
    %1850 = vmatpush1.msra.mxu0 0.0
    %1851 = vmatprep.subr.mxu0 0.0
    %1852 = vmatpush1.msra.mxu0 0.0
    %1853 = vmatprep.subr.mxu0 0.0
    %1854 = vmatpush1.msra.mxu0 0.0
    %1855 = vmatprep.subr.mxu0 0.0
    %1856 = vmatpush1.msra.mxu0 0.0
    %1857 = vmatprep.subr.mxu0 0.0
    %1858 = vmatpush1.msra.mxu0 0.0
    %1859 = vmatprep.subr.mxu0 0.0
    %1860 = vmatpush1.msra.mxu0 0.0
    %1861 = vmatprep.subr.mxu0 0.0
    %1862 = vmatpush1.msra.mxu0 0.0
    %1863 = vmatprep.subr.mxu0 0.0
    %1864 = vmatpush1.msra.mxu0 0.0
    %1865 = vmatprep.subr.mxu0 0.0
    %1866 = vmatpush1.msra.mxu0 0.0
    %1867 = vmatprep.subr.mxu0 0.0
    %1868 = vmatpush1.msra.mxu0 0.0
    %1869 = vmatprep.subr.mxu0 0.0
    %1870 = vmatpush1.msra.mxu0 0.0
    %1871 = vmatprep.subr.mxu0 0.0
    %1872 = vmatpush1.msra.mxu0 0.0
    %1873 = vmatprep.subr.mxu0 0.0
    %1874 = vmatpush1.msra.mxu0 0.0
    %1875 = vmatprep.subr.mxu0 0.0
    %1876 = vmatpush1.msra.mxu0 0.0
    %1877 = vmatprep.mubr.f32.mxu0 0.0
    %1878 = vmatmul.mubr.f32.gmra.mrb[0].mxu0 %v1811
    %v1879 = vpop.f32.mrb[0].mxu0
    %v1880 = vadd.f32 0.0, %v1879
    %v1881 = vpop.f32.mrb[0].mxu0
    %1882 = vdwg.mxu0
    %v1883 = vadd.f32 %v74, %v1880
    %v1884 = vxor.u32 %v1883, 2147483648
    %v1885 = vmul.f32 %v1884, 1.442695
    %v1886 = vpow.pop %v1885
    %v1887 = vadd.f32 %v1886, 1.0
    %v1888 = vrcp.pop %v1887
    %v1889 = vmul.f32 1.0, %v1888
    %v1890 = vtanh.pop %v1883
    %v1891 = vmul.f32 %v1889, %v1631
    %1893 = vrot.lane.b32.xlu0 %v1890, 64
    %v1894 = vpop.permute.xlu0 %1893
    %v1896 = vmul.f32 %v1889, %v1894
    %1898 = vrot.lane.b32.xlu0 %v1896, 32
    %v1899 = vpop.permute.xlu0 %1898
    %v1901 = vadd.f32 %v1891, %v1899
    %v1902 = vtanh.pop %v1901
    %1904 = vrot.lane.b32.xlu0 %v1902, 64
    %v1905 = vpop.permute.xlu0 %1904
    %v1907 = vmul.f32 %v1889, %v1905
    %1909 = vrot.lane.b32.xlu0 %v1807, 32
    %v1910 = vpop.permute.xlu0 %1909
    %v1911 = vsel %vm88, %v1910, 0
    %1913 = vmatprep.subr.mxu0 0.0
    %1914 = vmatpush1.msra.mxu0 %v83
    %1915 = vmatprep.subr.mxu0 0.0
    %1916 = vmatpush1.msra.mxu0 %v84
    %1917 = vmatprep.subr.mxu0 0.0
    %1918 = vmatpush1.msra.mxu0 %v85
    %1919 = vmatprep.subr.mxu0 0.0
    %1920 = vmatpush1.msra.mxu0 %v86
    %1921 = vmatprep.subr.mxu0 0.0
    %1922 = vmatpush1.msra.mxu0 0.0
    %1923 = vmatprep.subr.mxu0 0.0
    %1924 = vmatpush1.msra.mxu0 0.0
    %1925 = vmatprep.subr.mxu0 0.0
    %1926 = vmatpush1.msra.mxu0 0.0
    %1927 = vmatprep.subr.mxu0 0.0
    %1928 = vmatpush1.msra.mxu0 0.0
    %1929 = vmatprep.subr.mxu0 0.0
    %1930 = vmatpush1.msra.mxu0 0.0
    %1931 = vmatprep.subr.mxu0 0.0
    %1932 = vmatpush1.msra.mxu0 0.0
    %1933 = vmatprep.subr.mxu0 0.0
    %1934 = vmatpush1.msra.mxu0 0.0
    %1935 = vmatprep.subr.mxu0 0.0
    %1936 = vmatpush1.msra.mxu0 0.0
    %1937 = vmatprep.subr.mxu0 0.0
    %1938 = vmatpush1.msra.mxu0 0.0
    %1939 = vmatprep.subr.mxu0 0.0
    %1940 = vmatpush1.msra.mxu0 0.0
    %1941 = vmatprep.subr.mxu0 0.0
    %1942 = vmatpush1.msra.mxu0 0.0
    %1943 = vmatprep.subr.mxu0 0.0
    %1944 = vmatpush1.msra.mxu0 0.0
    %1945 = vmatprep.subr.mxu0 0.0
    %1946 = vmatpush1.msra.mxu0 0.0
    %1947 = vmatprep.subr.mxu0 0.0
    %1948 = vmatpush1.msra.mxu0 0.0
    %1949 = vmatprep.subr.mxu0 0.0
    %1950 = vmatpush1.msra.mxu0 0.0
    %1951 = vmatprep.subr.mxu0 0.0
    %1952 = vmatpush1.msra.mxu0 0.0
    %1953 = vmatprep.subr.mxu0 0.0
    %1954 = vmatpush1.msra.mxu0 0.0
    %1955 = vmatprep.subr.mxu0 0.0
    %1956 = vmatpush1.msra.mxu0 0.0
    %1957 = vmatprep.subr.mxu0 0.0
    %1958 = vmatpush1.msra.mxu0 0.0
    %1959 = vmatprep.subr.mxu0 0.0
    %1960 = vmatpush1.msra.mxu0 0.0
    %1961 = vmatprep.subr.mxu0 0.0
    %1962 = vmatpush1.msra.mxu0 0.0
    %1963 = vmatprep.subr.mxu0 0.0
    %1964 = vmatpush1.msra.mxu0 0.0
    %1965 = vmatprep.subr.mxu0 0.0
    %1966 = vmatpush1.msra.mxu0 0.0
    %1967 = vmatprep.subr.mxu0 0.0
    %1968 = vmatpush1.msra.mxu0 0.0
    %1969 = vmatprep.subr.mxu0 0.0
    %1970 = vmatpush1.msra.mxu0 0.0
    %1971 = vmatprep.subr.mxu0 0.0
    %1972 = vmatpush1.msra.mxu0 0.0
    %1973 = vmatprep.subr.mxu0 0.0
    %1974 = vmatpush1.msra.mxu0 0.0
    %1975 = vmatprep.subr.mxu0 0.0
    %1976 = vmatpush1.msra.mxu0 0.0
    %1977 = vmatprep.mubr.f32.mxu0 0.0
    %1978 = vmatmul.mubr.f32.gmra.mrb[0].mxu0 %v1911
    %v1979 = vpop.f32.mrb[0].mxu0
    %v1980 = vadd.f32 0.0, %v1979
    %v1981 = vpop.f32.mrb[0].mxu0
    %1982 = vdwg.mxu0
    %1983 = vmatprep.subr.mxu0 0.0
    %1984 = vmatpush1.msra.mxu0 %v79
    %1985 = vmatprep.subr.mxu0 0.0
    %1986 = vmatpush1.msra.mxu0 %v80
    %1987 = vmatprep.subr.mxu0 0.0
    %1988 = vmatpush1.msra.mxu0 %v81
    %1989 = vmatprep.subr.mxu0 0.0
    %1990 = vmatpush1.msra.mxu0 %v82
    %1991 = vmatprep.subr.mxu0 0.0
    %1992 = vmatpush1.msra.mxu0 0.0
    %1993 = vmatprep.subr.mxu0 0.0
    %1994 = vmatpush1.msra.mxu0 0.0
    %1995 = vmatprep.subr.mxu0 0.0
    %1996 = vmatpush1.msra.mxu0 0.0
    %1997 = vmatprep.subr.mxu0 0.0
    %1998 = vmatpush1.msra.mxu0 0.0
    %1999 = vmatprep.subr.mxu0 0.0
    %2000 = vmatpush1.msra.mxu0 0.0
    %2001 = vmatprep.subr.mxu0 0.0
    %2002 = vmatpush1.msra.mxu0 0.0
    %2003 = vmatprep.subr.mxu0 0.0
    %2004 = vmatpush1.msra.mxu0 0.0
    %2005 = vmatprep.subr.mxu0 0.0
    %2006 = vmatpush1.msra.mxu0 0.0
    %2007 = vmatprep.subr.mxu0 0.0
    %2008 = vmatpush1.msra.mxu0 0.0
    %2009 = vmatprep.subr.mxu0 0.0
    %2010 = vmatpush1.msra.mxu0 0.0
    %2011 = vmatprep.subr.mxu0 0.0
    %2012 = vmatpush1.msra.mxu0 0.0
    %2013 = vmatprep.subr.mxu0 0.0
    %2014 = vmatpush1.msra.mxu0 0.0
    %2015 = vmatprep.subr.mxu0 0.0
    %2016 = vmatpush1.msra.mxu0 0.0
    %2017 = vmatprep.subr.mxu0 0.0
    %2018 = vmatpush1.msra.mxu0 0.0
    %2019 = vmatprep.subr.mxu0 0.0
    %2020 = vmatpush1.msra.mxu0 0.0
    %2021 = vmatprep.subr.mxu0 0.0
    %2022 = vmatpush1.msra.mxu0 0.0
    %2023 = vmatprep.subr.mxu0 0.0
    %2024 = vmatpush1.msra.mxu0 0.0
    %2025 = vmatprep.subr.mxu0 0.0
    %2026 = vmatpush1.msra.mxu0 0.0
    %2027 = vmatprep.subr.mxu0 0.0
    %2028 = vmatpush1.msra.mxu0 0.0
    %2029 = vmatprep.subr.mxu0 0.0
    %2030 = vmatpush1.msra.mxu0 0.0
    %2031 = vmatprep.subr.mxu0 0.0
    %2032 = vmatpush1.msra.mxu0 0.0
    %2033 = vmatprep.subr.mxu0 0.0
    %2034 = vmatpush1.msra.mxu0 0.0
    %2035 = vmatprep.subr.mxu0 0.0
    %2036 = vmatpush1.msra.mxu0 0.0
    %2037 = vmatprep.subr.mxu0 0.0
    %2038 = vmatpush1.msra.mxu0 0.0
    %2039 = vmatprep.subr.mxu0 0.0
    %2040 = vmatpush1.msra.mxu0 0.0
    %2041 = vmatprep.subr.mxu0 0.0
    %2042 = vmatpush1.msra.mxu0 0.0
    %2043 = vmatprep.subr.mxu0 0.0
    %2044 = vmatpush1.msra.mxu0 0.0
    %2045 = vmatprep.subr.mxu0 0.0
    %2046 = vmatpush1.msra.mxu0 0.0
    %2047 = vmatprep.mubr.f32.mxu0 0.0
    %2048 = vmatmul.mubr.f32.gmra.mrb[0].mxu0 %v1811
    %v2049 = vpop.f32.mrb[0].mxu0
    %v2050 = vadd.f32 %v1980, %v2049
    %v2051 = vpop.f32.mrb[0].mxu0
    %2052 = vdwg.mxu0
    %v2053 = vadd.f32 %v2050, %v431
    %v2054 = vxor.u32 %v2053, 2147483648
    %v2055 = vmul.f32 %v2054, 1.442695
    %v2056 = vpow.pop %v2055
    %v2057 = vadd.f32 %v2056, 1.0
    %v2058 = vrcp.pop %v2057
    %v2059 = vmul.f32 1.0, %v2058
    %v2060 = vtanh.pop %v2053
    %v2061 = vmul.f32 %v2059, %v1801
    %2063 = vrot.lane.b32.xlu0 %v2060, 64
    %v2064 = vpop.permute.xlu0 %2063
    %v2066 = vmul.f32 %v2059, %v2064
    %2068 = vrot.lane.b32.xlu0 %v2066, 32
    %v2069 = vpop.permute.xlu0 %2068
    %v2071 = vadd.f32 %v2061, %v2069
    %v2072 = vtanh.pop %v2071
    %2074 = vrot.lane.b32.xlu0 %v2072, 64
    %v2075 = vpop.permute.xlu0 %2074
    %v2077 = vmul.f32 %v2059, %v2075
    %2079 = vrot.lane.b32.xlu0 %v2077, 32
    %v2080 = vpop.permute.xlu0 %2079
    %v2081 = vsel %vm88, %v2080, 0
    %2083 = vmatprep.subr.mxu0 0.0
    %2084 = vmatpush1.msra.mxu0 %v83
    %2085 = vmatprep.subr.mxu0 0.0
    %2086 = vmatpush1.msra.mxu0 %v84
    %2087 = vmatprep.subr.mxu0 0.0
    %2088 = vmatpush1.msra.mxu0 %v85
    %2089 = vmatprep.subr.mxu0 0.0
    %2090 = vmatpush1.msra.mxu0 %v86
    %2091 = vmatprep.subr.mxu0 0.0
    %2092 = vmatpush1.msra.mxu0 0.0
    %2093 = vmatprep.subr.mxu0 0.0
    %2094 = vmatpush1.msra.mxu0 0.0
    %2095 = vmatprep.subr.mxu0 0.0
    %2096 = vmatpush1.msra.mxu0 0.0
    %2097 = vmatprep.subr.mxu0 0.0
    %2098 = vmatpush1.msra.mxu0 0.0
    %2099 = vmatprep.subr.mxu0 0.0
    %2100 = vmatpush1.msra.mxu0 0.0
    %2101 = vmatprep.subr.mxu0 0.0
    %2102 = vmatpush1.msra.mxu0 0.0
    %2103 = vmatprep.subr.mxu0 0.0
    %2104 = vmatpush1.msra.mxu0 0.0
    %2105 = vmatprep.subr.mxu0 0.0
    %2106 = vmatpush1.msra.mxu0 0.0
    %2107 = vmatprep.subr.mxu0 0.0
    %2108 = vmatpush1.msra.mxu0 0.0
    %2109 = vmatprep.subr.mxu0 0.0
    %2110 = vmatpush1.msra.mxu0 0.0
    %2111 = vmatprep.subr.mxu0 0.0
    %2112 = vmatpush1.msra.mxu0 0.0
    %2113 = vmatprep.subr.mxu0 0.0
    %2114 = vmatpush1.msra.mxu0 0.0
    %2115 = vmatprep.subr.mxu0 0.0
    %2116 = vmatpush1.msra.mxu0 0.0
    %2117 = vmatprep.subr.mxu0 0.0
    %2118 = vmatpush1.msra.mxu0 0.0
    %2119 = vmatprep.subr.mxu0 0.0
    %2120 = vmatpush1.msra.mxu0 0.0
    %2121 = vmatprep.subr.mxu0 0.0
    %2122 = vmatpush1.msra.mxu0 0.0
    %2123 = vmatprep.subr.mxu0 0.0
    %2124 = vmatpush1.msra.mxu0 0.0
    %2125 = vmatprep.subr.mxu0 0.0
    %2126 = vmatpush1.msra.mxu0 0.0
    %2127 = vmatprep.subr.mxu0 0.0
    %2128 = vmatpush1.msra.mxu0 0.0
    %2129 = vmatprep.subr.mxu0 0.0
    %2130 = vmatpush1.msra.mxu0 0.0
    %2131 = vmatprep.subr.mxu0 0.0
    %2132 = vmatpush1.msra.mxu0 0.0
    %2133 = vmatprep.subr.mxu0 0.0
    %2134 = vmatpush1.msra.mxu0 0.0
    %2135 = vmatprep.subr.mxu0 0.0
    %2136 = vmatpush1.msra.mxu0 0.0
    %2137 = vmatprep.subr.mxu0 0.0
    %2138 = vmatpush1.msra.mxu0 0.0
    %2139 = vmatprep.subr.mxu0 0.0
    %2140 = vmatpush1.msra.mxu0 0.0
    %2141 = vmatprep.subr.mxu0 0.0
    %2142 = vmatpush1.msra.mxu0 0.0
    %2143 = vmatprep.subr.mxu0 0.0
    %2144 = vmatpush1.msra.mxu0 0.0
    %2145 = vmatprep.subr.mxu0 0.0
    %2146 = vmatpush1.msra.mxu0 0.0
    %2147 = vmatprep.mubr.f32.mxu0 0.0
    %2148 = vmatmul.mubr.f32.gmra.mrb[0].mxu0 %v2081
    %v2149 = vpop.f32.mrb[0].mxu0
    %v2150 = vadd.f32 0.0, %v2149
    %v2151 = vpop.f32.mrb[0].mxu0
    %2152 = vdwg.mxu0
    %2154 = vrot.lane.b32.xlu0 %v1907, 32
    %v2155 = vpop.permute.xlu0 %2154
    %v2156 = vsel %vm88, %v2155, 0
    %2158 = vmatprep.subr.mxu0 0.0
    %2159 = vmatpush1.msra.mxu0 %v79
    %2160 = vmatprep.subr.mxu0 0.0
    %2161 = vmatpush1.msra.mxu0 %v80
    %2162 = vmatprep.subr.mxu0 0.0
    %2163 = vmatpush1.msra.mxu0 %v81
    %2164 = vmatprep.subr.mxu0 0.0
    %2165 = vmatpush1.msra.mxu0 %v82
    %2166 = vmatprep.subr.mxu0 0.0
    %2167 = vmatpush1.msra.mxu0 0.0
    %2168 = vmatprep.subr.mxu0 0.0
    %2169 = vmatpush1.msra.mxu0 0.0
    %2170 = vmatprep.subr.mxu0 0.0
    %2171 = vmatpush1.msra.mxu0 0.0
    %2172 = vmatprep.subr.mxu0 0.0
    %2173 = vmatpush1.msra.mxu0 0.0
    %2174 = vmatprep.subr.mxu0 0.0
    %2175 = vmatpush1.msra.mxu0 0.0
    %2176 = vmatprep.subr.mxu0 0.0
    %2177 = vmatpush1.msra.mxu0 0.0
    %2178 = vmatprep.subr.mxu0 0.0
    %2179 = vmatpush1.msra.mxu0 0.0
    %2180 = vmatprep.subr.mxu0 0.0
    %2181 = vmatpush1.msra.mxu0 0.0
    %2182 = vmatprep.subr.mxu0 0.0
    %2183 = vmatpush1.msra.mxu0 0.0
    %2184 = vmatprep.subr.mxu0 0.0
    %2185 = vmatpush1.msra.mxu0 0.0
    %2186 = vmatprep.subr.mxu0 0.0
    %2187 = vmatpush1.msra.mxu0 0.0
    %2188 = vmatprep.subr.mxu0 0.0
    %2189 = vmatpush1.msra.mxu0 0.0
    %2190 = vmatprep.subr.mxu0 0.0
    %2191 = vmatpush1.msra.mxu0 0.0
    %2192 = vmatprep.subr.mxu0 0.0
    %2193 = vmatpush1.msra.mxu0 0.0
    %2194 = vmatprep.subr.mxu0 0.0
    %2195 = vmatpush1.msra.mxu0 0.0
    %2196 = vmatprep.subr.mxu0 0.0
    %2197 = vmatpush1.msra.mxu0 0.0
    %2198 = vmatprep.subr.mxu0 0.0
    %2199 = vmatpush1.msra.mxu0 0.0
    %2200 = vmatprep.subr.mxu0 0.0
    %2201 = vmatpush1.msra.mxu0 0.0
    %2202 = vmatprep.subr.mxu0 0.0
    %2203 = vmatpush1.msra.mxu0 0.0
    %2204 = vmatprep.subr.mxu0 0.0
    %2205 = vmatpush1.msra.mxu0 0.0
    %2206 = vmatprep.subr.mxu0 0.0
    %2207 = vmatpush1.msra.mxu0 0.0
    %2208 = vmatprep.subr.mxu0 0.0
    %2209 = vmatpush1.msra.mxu0 0.0
    %2210 = vmatprep.subr.mxu0 0.0
    %2211 = vmatpush1.msra.mxu0 0.0
    %2212 = vmatprep.subr.mxu0 0.0
    %2213 = vmatpush1.msra.mxu0 0.0
    %2214 = vmatprep.subr.mxu0 0.0
    %2215 = vmatpush1.msra.mxu0 0.0
    %2216 = vmatprep.subr.mxu0 0.0
    %2217 = vmatpush1.msra.mxu0 0.0
    %2218 = vmatprep.subr.mxu0 0.0
    %2219 = vmatpush1.msra.mxu0 0.0
    %2220 = vmatprep.subr.mxu0 0.0
    %2221 = vmatpush1.msra.mxu0 0.0
    %2222 = vmatprep.mubr.f32.mxu0 0.0
    %2223 = vmatmul.mubr.f32.gmra.mrb[0].mxu0 %v2156
    %v2224 = vpop.f32.mrb[0].mxu0
    %v2225 = vadd.f32 %v2150, %v2224
    %v2226 = vpop.f32.mrb[0].mxu0
    %2227 = vdwg.mxu0
    %v2228 = vadd.f32 %v2225, %v431
    %v2229 = vxor.u32 %v2228, 2147483648
    %v2230 = vmul.f32 %v2229, 1.442695
    %v2231 = vpow.pop %v2230
    %v2232 = vadd.f32 %v2231, 1.0
    %v2233 = vrcp.pop %v2232
    %v2234 = vmul.f32 1.0, %v2233
    %v2235 = vtanh.pop %v2228
    %v2236 = vmul.f32 %v2234, %v2071
    %2238 = vrot.lane.b32.xlu0 %v2235, 64
    %v2239 = vpop.permute.xlu0 %2238
    %v2241 = vmul.f32 %v2234, %v2239
    %2243 = vrot.lane.b32.xlu0 %v2241, 32
    %v2244 = vpop.permute.xlu0 %2243
    %v2246 = vadd.f32 %v2236, %v2244
    %v2247 = vtanh.pop %v2246
    %2249 = vrot.lane.b32.xlu0 %v2247, 64
    %v2250 = vpop.permute.xlu0 %2249
    %v2252 = vmul.f32 %v2234, %v2250
    %v2253 = vld [vmem:[%s5] sm:$0xff]
    %v2254 = vld [vmem:[%s5 + $0x8] sm:$0xff]
    %v2255 = vld [vmem:[%s5 + $0x10] sm:$0xff]
    %v2256 = vld [vmem:[%s5 + $0x18] sm:$0xff]
    %v2257 = vld [vmem:[%s6] sm:$0x1]
    %v2259 = vlaneseq
    %v2260 = vshrl.u32 %v2259, 7
    %v2261 = vsub.s32 0, %v2260
    %v2262 = vrot.slane %v2257, %v2261
    %2265 = vrot.lane.b32.xlu0 %v2252, 32
    %v2266 = vpop.permute.xlu0 %2265
    %v2267 = vsel %vm88, %v2266, 0
    %2269 = vmatprep.subr.mxu0 0.0
    %2270 = vmatpush1.msra.mxu0 %v2253
    %2271 = vmatprep.subr.mxu0 0.0
    %2272 = vmatpush1.msra.mxu0 %v2254
    %2273 = vmatprep.subr.mxu0 0.0
    %2274 = vmatpush1.msra.mxu0 %v2255
    %2275 = vmatprep.subr.mxu0 0.0
    %2276 = vmatpush1.msra.mxu0 %v2256
    %2277 = vmatprep.subr.mxu0 0.0
    %2278 = vmatpush1.msra.mxu0 0.0
    %2279 = vmatprep.subr.mxu0 0.0
    %2280 = vmatpush1.msra.mxu0 0.0
    %2281 = vmatprep.subr.mxu0 0.0
    %2282 = vmatpush1.msra.mxu0 0.0
    %2283 = vmatprep.subr.mxu0 0.0
    %2284 = vmatpush1.msra.mxu0 0.0
    %2285 = vmatprep.subr.mxu0 0.0
    %2286 = vmatpush1.msra.mxu0 0.0
    %2287 = vmatprep.subr.mxu0 0.0
    %2288 = vmatpush1.msra.mxu0 0.0
    %2289 = vmatprep.subr.mxu0 0.0
    %2290 = vmatpush1.msra.mxu0 0.0
    %2291 = vmatprep.subr.mxu0 0.0
    %2292 = vmatpush1.msra.mxu0 0.0
    %2293 = vmatprep.subr.mxu0 0.0
    %2294 = vmatpush1.msra.mxu0 0.0
    %2295 = vmatprep.subr.mxu0 0.0
    %2296 = vmatpush1.msra.mxu0 0.0
    %2297 = vmatprep.subr.mxu0 0.0
    %2298 = vmatpush1.msra.mxu0 0.0
    %2299 = vmatprep.subr.mxu0 0.0
    %2300 = vmatpush1.msra.mxu0 0.0
    %2301 = vmatprep.subr.mxu0 0.0
    %2302 = vmatpush1.msra.mxu0 0.0
    %2303 = vmatprep.subr.mxu0 0.0
    %2304 = vmatpush1.msra.mxu0 0.0
    %2305 = vmatprep.subr.mxu0 0.0
    %2306 = vmatpush1.msra.mxu0 0.0
    %2307 = vmatprep.subr.mxu0 0.0
    %2308 = vmatpush1.msra.mxu0 0.0
    %2309 = vmatprep.subr.mxu0 0.0
    %2310 = vmatpush1.msra.mxu0 0.0
    %2311 = vmatprep.subr.mxu0 0.0
    %2312 = vmatpush1.msra.mxu0 0.0
    %2313 = vmatprep.subr.mxu0 0.0
    %2314 = vmatpush1.msra.mxu0 0.0
    %2315 = vmatprep.subr.mxu0 0.0
    %2316 = vmatpush1.msra.mxu0 0.0
    %2317 = vmatprep.subr.mxu0 0.0
    %2318 = vmatpush1.msra.mxu0 0.0
    %2319 = vmatprep.subr.mxu0 0.0
    %2320 = vmatpush1.msra.mxu0 0.0
    %2321 = vmatprep.subr.mxu0 0.0
    %2322 = vmatpush1.msra.mxu0 0.0
    %2323 = vmatprep.subr.mxu0 0.0
    %2324 = vmatpush1.msra.mxu0 0.0
    %2325 = vmatprep.subr.mxu0 0.0
    %2326 = vmatpush1.msra.mxu0 0.0
    %2327 = vmatprep.subr.mxu0 0.0
    %2328 = vmatpush1.msra.mxu0 0.0
    %2329 = vmatprep.subr.mxu0 0.0
    %2330 = vmatpush1.msra.mxu0 0.0
    %2331 = vmatprep.subr.mxu0 0.0
    %2332 = vmatpush1.msra.mxu0 0.0
    %2333 = vmatprep.mubr.f32.mxu0 0.0
    %2334 = vmatmul.mubr.f32.gmra.mrb[0].mxu0 %v2267
    %v2335 = vpop.f32.mrb[0].mxu0
    %v2336 = vadd.f32 %v2262, %v2335
    %v2337 = vpop.f32.mrb[0].mxu0
    %2338 = vdwg.mxu0
    %vm2339 = vcmask 15360
    %2340 = vst.msk [vmem:[%s7] sm:$0xff] %vm2339, %v2336
    // Predicated region
    $region42: #{tpu_custom_call.1} parent=1 // pred_check
      _
    $region43: #{tpu_custom_call.1} parent=1 // pred_check_branch
      %2342 = sbr.rel (0) target = $region45
    $region44: #{tpu_custom_call.1} parent=1 // pred_region
      _
    $region45: #{tpu_custom_call.1} parent=1 // pred_fallthru
      _
    // Predicated region
    $region46: #{tpu_custom_call.1} parent=1 // pred_check
      _
    $region47: #{tpu_custom_call.1} parent=1 // pred_check_branch
      %2344 = sbr.rel (0) target = $region49
    $region48: #{tpu_custom_call.1} parent=1 // pred_region
      _
    $region49: #{tpu_custom_call.1} parent=1 // pred_fallthru
      _
    %2345 = vsyncpa [#allocation3], 1
    %2346 = vsyncpa [#allocation5], 1

</llo_original>
